<compile_context>
chip_gen: v7x
topology: tpu7x:2x2x1
jax: 0.10.0
libtpu: 0.0.40
codegen_flags: <defaults>
</compile_context>

<pallas_src>
from functools import partial

import jax
import jax.numpy as jnp
from jax.experimental import pallas as pl
from jax.experimental.pallas import tpu as pltpu

EPS = 1e-5


# ----------------------------------------------------------------------------- kernels --
def _conv3x3_folded(x2d, w_ref, H):
    """3x3 / pad-1 / stride-1 conv as 3 row-shifted MXU matmuls in the folded layout.

    x2d  : (M, L) matmul-dtype, M = B_blk*H rows (B_blk images stacked along rows),
           lanes = c*W + w (zero-padded to L).
    w_ref: (3, L, L) block-banded Toeplitz matrices (one per ky tap).
    Returns (M, L) float32.  out[r] = x[r-1] @ W0 + x[r] @ W1 + x[r+1] @ W2 with
    per-image zero boundaries (no halo staging copy, no padded scratch).
    """
    M, L = x2d.shape
    mid = jnp.dot(x2d, w_ref[1], preferred_element_type=jnp.float32)
    up = jnp.dot(x2d, w_ref[0], preferred_element_type=jnp.float32)
    dn = jnp.dot(x2d, w_ref[2], preferred_element_type=jnp.float32)
    zrow = jnp.zeros((1, L), jnp.float32)
    up_sh = jnp.concatenate([zrow, up[:M - 1]], axis=0)   # up_sh[r] = up[r-1], row 0 -> 0
    dn_sh = jnp.concatenate([dn[1:], zrow], axis=0)       # dn_sh[r] = dn[r+1], row M-1 -> 0
    if M != H:
        # more than one image stacked along rows: kill cross-image leakage at boundaries
        r = jax.lax.broadcasted_iota(jnp.int32, (M, L), 0) % H
        up_sh = jnp.where(r != 0, up_sh, 0.0)
        dn_sh = jnp.where(r != H - 1, dn_sh, 0.0)
    return mid + up_sh + dn_sh


def conv1_stats_kernel(x_ref, w1_ref, y1_ref, s1_ref):
    # x_ref : (B_blk, H, L) matmul dtype     w1_ref: (3, L, L) matmul dtype
    # y1_ref: (B_blk, H, L) store dtype      s1_ref: (1, 2, L) f32 partial stats
    B, H, L = x_ref.shape
    x2d = x_ref[...].reshape(B * H, L)
    acc = _conv3x3_folded(x2d, w1_ref, H)                 # (B*H, L) f32
    y1_ref[...] = acc.astype(y1_ref.dtype).reshape(B, H, L)
    # stats taken from the f32 accumulator in a single fused pass (sum, sum-of-squares)
    s1_ref[:, 0:1, :] = jnp.sum(acc, axis=0, keepdims=True)[None]
    s1_ref[:, 1:2, :] = jnp.sum(acc * acc, axis=0, keepdims=True)[None]


def bn1_relu_conv2_stats_kernel(y1_ref, sc1_ref, sh1_ref, w2_ref, y2_ref, s2_ref):
    # y1_ref: (B_blk, H, L)   sc1/sh1: (1, L) f32 tiled per-channel scale/shift
    # w2_ref: (3, L, L)       y2_ref: (B_blk, H, L)   s2_ref: (1, 2, L) f32
    B, H, L = y1_ref.shape
    h = y1_ref[...].reshape(B * H, L).astype(jnp.float32) * sc1_ref[...] + sh1_ref[...]
    h = jnp.maximum(h, 0.0)                               # BN1 + ReLU in f32
    acc = _conv3x3_folded(h.astype(w2_ref.dtype), w2_ref, H)
    y2_ref[...] = acc.astype(y2_ref.dtype).reshape(B, H, L)
    s2_ref[:, 0:1, :] = jnp.sum(acc, axis=0, keepdims=True)[None]
    s2_ref[:, 1:2, :] = jnp.sum(acc * acc, axis=0, keepdims=True)[None]


def bn2_residual_relu_kernel(y2_ref, sc2_ref, sh2_ref, xid_ref, o_ref):
    # y2_ref: (B_blk, H, L)   sc2/sh2: (1, L) f32   xid_ref/o_ref: (B_blk, H, L) f32
    B, H, L = y2_ref.shape
    out = y2_ref[...].reshape(B * H, L).astype(jnp.float32) * sc2_ref[...] + sh2_ref[...]
    out = out + xid_ref[...].reshape(B * H, L)            # BN2 + identity residual
    o_ref[...] = jnp.maximum(out, 0.0).reshape(B, H, L)   # ReLU


# ----------------------------------------------------------------------------- wrapper --
def _toeplitz_weights_cw(w, W, L, matmul_dtype):
    """(3,3,Cin,Cout) HWIO conv weights -> (3, L, L) block-banded Toeplitz matrices.

    Lane layout is c*W + w.  Wmat_ky[ci*W+wi, co*W+wo] = w[ky, wi-wo+1, ci, co] when the
    tap is in range, 0 otherwise (this realizes the zero padding along W for free).
    Padded lanes (>= C*W) get zero rows/cols, so padded outputs stay exactly zero.
    """
    Cin, Cout = w.shape[2], w.shape[3]
    mats = []
    for ky in range(3):
        m = sum(jnp.kron(w[ky, kx], jnp.eye(W, W, k=1 - kx, dtype=w.dtype))
                for kx in range(3))                       # (Cin*W, Cout*W)
        mats.append(m)
    wm = jnp.stack(mats, axis=0)
    wm = jnp.pad(wm, ((0, 0), (0, L - Cin * W), (0, L - Cout * W)))
    return wm.astype(matmul_dtype)


def _bn_scale_shift(partials, gamma, beta, m_total, C, W, L):
    """Fold per-step partial [sum; sumsq] (steps, 2, L) into per-channel BN scale/shift.

    Tiny cross-step reduction done in XLA between Pallas passes (glue): global mean and
    biased variance over (N,H,W), then scale = g*rsqrt(var+eps), shift = b - mean*scale,
    tiled back to the folded c*W+w lane layout (padded lanes get 0 -> outputs stay 0).
    """
    tot = jnp.sum(partials[:, :, :C * W].reshape(-1, 2, C, W), axis=(0, 3))   # (2, C)
    mean = tot[0] / m_total
    var = tot[1] / m_total - mean * mean                   # biased (training BN)
    scale = gamma * jax.lax.rsqrt(var + EPS)
    shift = beta - mean * scale
    scale_l = jnp.pad(jnp.repeat(scale, W), (0, L - C * W)).reshape(1, L).astype(jnp.float32)
    shift_l = jnp.pad(jnp.repeat(shift, W), (0, L - C * W)).reshape(1, L).astype(jnp.float32)
    return scale_l, shift_l


def _pick_batch_block(N, H, target_rows=256, min_steps=8):
    """Largest divisor of N with B_blk*H ~<= target_rows; keep >=min_steps grid steps
    when the batch is large enough (v7x pipelining / megacore)."""
    cap = max(1, target_rows // max(H, 1))
    if N >= min_steps:
        cap = min(cap, max(1, N // min_steps))
    b = 1
    for d in range(1, N + 1):
        if N % d == 0 and d <= cap:
            b = d
    return b


def basic_block_forward(x_nchw, params, matmul_dtype=jnp.bfloat16):
    """x_nchw: (N, C, H, W) float32; returns (N, C, H, W) float32."""
    w1, g1, b1, w2, g2, b2 = params
    N, C, H, W = x_nchw.shape
    Cout = w1.shape[-1]
    # stride=1 / downsample=None config of BasicBlock => inplanes must equal planes.
    assert C == Cout, "identity residual requires inplanes == planes (stride=1, no downsample)"

    CW = C * W
    L = ((CW + 127) // 128) * 128                 # lane-dense folded width (multiple of 128)
    store_dtype = matmul_dtype                    # bf16 intermediates on the fast path

    # Fold NCHW -> (N, H, C*W): (0,2,1,3) transpose keeps W minor (cheap), pad lanes to L.
    # TODO(synk): folding this transpose into pass 1 / the final one into pass 3 would
    # remove two XLA relayouts of the activation; kept as wrapper glue here.
    xf = jnp.transpose(x_nchw.astype(jnp.float32), (0, 2, 1, 3)).reshape(N, H, CW)
    xf = jnp.pad(xf, ((0, 0), (0, 0), (0, L - CW)))          # f32 identity for the residual
    xmx = xf.astype(matmul_dtype)                             # MXU-operand copy of the input

    w1m = _toeplitz_weights_cw(w1, W, L, matmul_dtype)        # (3, L, L)
    w2m = _toeplitz_weights_cw(w2, W, L, matmul_dtype)

    B_blk = _pick_batch_block(N, H)               # images packed into the matmul M dim
    n_steps = N // B_blk                          # == 1 at the tiny demo batch (N=2)

    img_in_spec = pl.BlockSpec((B_blk, H, L), lambda n: (n, 0, 0))
    img_st_spec = pl.BlockSpec((B_blk, H, L), lambda n: (n, 0, 0))
    stats_spec = pl.BlockSpec((1, 2, L), lambda n: (n, 0, 0))
    wmat_spec = pl.BlockSpec((3, L, L), lambda n: (0, 0, 0))
    vec_spec = pl.BlockSpec((1, L), lambda n: (0, 0))

    # VMEM budget from actual block sizes (2x for double buffering + headroom), v7x-safe.
    isz_mx = jnp.dtype(matmul_dtype).itemsize
    isz_st = jnp.dtype(store_dtype).itemsize
    blk_bytes = (B_blk * H * L * (isz_mx + isz_st + 4 + 4)    # in/out/image/identity blocks
                 + 3 * L * L * isz_mx                         # Toeplitz weights
                 + 2 * L * 4 + 2 * L * 4)                     # stats + scale/shift vectors
    vlimit = int(min(64 << 20, max(16 << 20, 2 * blk_bytes + (4 << 20))))
    cparams = pltpu.CompilerParams(dimension_semantics=("parallel",),
                                   vmem_limit_bytes=vlimit)

    # ---- pass 1: conv1 + per-step BN1 partial statistics --------------------------------
    y1, s1 = pl.pallas_call(
        conv1_stats_kernel,
        out_shape=(jax.ShapeDtypeStruct((N, H, L), store_dtype),
                   jax.ShapeDtypeStruct((n_steps, 2, L), jnp.float32)),
        grid_spec=pltpu.PrefetchScalarGridSpec(
            num_scalar_prefetch=0, grid=(n_steps,),
            in_specs=[img_in_spec, wmat_spec],
            out_specs=[img_st_spec, stats_spec]),
        compiler_params=cparams,
    )(xmx, w1m)

    sc1, sh1 = _bn_scale_shift(s1, g1, b1, N * H * W, C, W, L)

    # ---- pass 2: BN1 + ReLU + conv2 + per-step BN2 partial statistics --------------------
    y2, s2 = pl.pallas_call(
        bn1_relu_conv2_stats_kernel,
        out_shape=(jax.ShapeDtypeStruct((N, H, L), store_dtype),
                   jax.ShapeDtypeStruct((n_steps, 2, L), jnp.float32)),
        grid_spec=pltpu.PrefetchScalarGridSpec(
            num_scalar_prefetch=0, grid=(n_steps,),
            in_specs=[img_in_spec, vec_spec, vec_spec, wmat_spec],
            out_specs=[img_st_spec, stats_spec]),
        compiler_params=cparams,
    )(y1, sc1, sh1, w2m)

    sc2, sh2 = _bn_scale_shift(s2, g2, b2, N * H * W, C, W, L)

    # ---- pass 3: BN2 + residual add + ReLU (pure elementwise, lane-dense big blocks) -----
    out = pl.pallas_call(
        bn2_residual_relu_kernel,
        out_shape=jax.ShapeDtypeStruct((N, H, L), jnp.float32),
        grid_spec=pltpu.PrefetchScalarGridSpec(
            num_scalar_prefetch=0, grid=(n_steps,),
            in_specs=[img_in_spec, vec_spec, vec_spec,
                      pl.BlockSpec((B_blk, H, L), lambda n: (n, 0, 0))],
            out_specs=pl.BlockSpec((B_blk, H, L), lambda n: (n, 0, 0))),
        compiler_params=cparams,
    )(y2, sc2, sh2, xf)

    out = out[:, :, :CW].reshape(N, H, C, W)
    return jnp.transpose(out, (0, 2, 1, 3))       # -> NCHW


# --------------------------------------------------------------------------- reference --
def basic_block_reference(x_nchw, params, matmul_dtype=jnp.float32):
    """Plain-JAX reference (same semantics; matmul-operand precision configurable)."""
    w1, g1, b1, w2, g2, b2 = params
    x = jnp.transpose(x_nchw, (0, 2, 3, 1)).astype(jnp.float32)

    def conv(v, w):
        return jax.lax.conv_general_dilated(
            v.astype(matmul_dtype), w.astype(matmul_dtype),
            window_strides=(1, 1), padding=((1, 1), (1, 1)),
            dimension_numbers=("NHWC", "HWIO", "NHWC"),
            preferred_element_type=jnp.float32)

    def bn(v, g, b):
        m = jnp.mean(v, axis=(0, 1, 2))
        var = jnp.mean((v - m) ** 2, axis=(0, 1, 2))
        return (v - m) * jax.lax.rsqrt(var + EPS) * g + b

    out = jnp.maximum(bn(conv(x, w1), g1, b1), 0.0)
    out = bn(conv(out, w2), g2, b2) + x
    out = jnp.maximum(out, 0.0)
    return jnp.transpose(out, (0, 3, 1, 2))


if __name__ == "__main__":
    # Small shapes: batch=2, inplanes=planes=4, spatial 16x16 (stride=1, no downsample).
    N, C, H, W = 2, 4, 16, 16
    key = jax.random.PRNGKey(0)
    k_x, k_w1, k_w2, k_g1, k_b1, k_g2, k_b2 = jax.random.split(key, 7)

    x = jax.random.normal(k_x, (N, C, H, W), dtype=jnp.float32)
    w1 = 0.1 * jax.random.normal(k_w1, (3, 3, C, C), dtype=jnp.float32)   # HWIO
    w2 = 0.1 * jax.random.normal(k_w2, (3, 3, C, C), dtype=jnp.float32)
    g1 = 1.0 + 0.1 * jax.random.normal(k_g1, (C,), dtype=jnp.float32)
    b1 = 0.1 * jax.random.normal(k_b1, (C,), dtype=jnp.float32)
    g2 = 1.0 + 0.1 * jax.random.normal(k_g2, (C,), dtype=jnp.float32)
    b2 = 0.1 * jax.random.normal(k_b2, (C,), dtype=jnp.float32)
    params = (w1, g1, b1, w2, g2, b2)

    # Exact-precision path (f32 MXU operands, f32 intermediates): must match f32 reference.
    fwd_f32 = jax.jit(partial(basic_block_forward, matmul_dtype=jnp.float32))
    out_f32 = jax.block_until_ready(fwd_f32(x, params))
    ref_f32 = jax.block_until_ready(basic_block_reference(x, params, jnp.float32))
    assert out_f32.shape == (N, C, H, W) and out_f32.dtype == jnp.float32
    assert jnp.allclose(out_f32, ref_f32, atol=2e-3, rtol=2e-3), "f32 path mismatch vs reference"

    # Fast path (bf16 MXU operands + bf16 intermediates, f32 accumulation) vs a reference
    # with bf16 conv operands; tolerance also covers bf16 rounding of the stored y1/y2.
    fwd_bf16 = jax.jit(partial(basic_block_forward, matmul_dtype=jnp.bfloat16))
    out_bf16 = jax.block_until_ready(fwd_bf16(x, params))
    ref_bf16 = jax.block_until_ready(basic_block_reference(x, params, jnp.bfloat16))
    assert out_bf16.shape == (N, C, H, W) and out_bf16.dtype == jnp.float32
    assert jnp.allclose(out_bf16, ref_bf16, atol=3e-2, rtol=3e-2), "bf16 path mismatch vs reference"

    print("KERNEL_OK")
</pallas_src>

<mosaic_0001>
module attributes {stable_mosaic.version = 11 : i64} {
  func.func @conv1_stats_kernel(%arg0: i32, %arg1: memref<2x16x128xf32, #tpu.memory_space<vmem>>, %arg2: memref<3x128x128xf32, #tpu.memory_space<vmem>>, %arg3: memref<2x16x128xf32, #tpu.memory_space<vmem>>, %arg4: memref<1x2x128xf32, #tpu.memory_space<vmem>>) attributes {dimension_semantics = [#tpu.dimension_semantics<parallel>], iteration_bounds = array<i64: 1>, scalar_prefetch = 0 : i64, scratch_operands = 0 : i64, tpu.core_type = #tpu.core_type<tc>, window_params = [{transform_indices = @transform_0, window_bounds = array<i64: 2, 16, 128>}, {pipeline_mode = #tpu.pipeline_mode<synchronous>, transform_indices = @transform_1, window_bounds = array<i64: 3, 128, 128>}, {transform_indices = @transform_2, window_bounds = array<i64: 2, 16, 128>}, {transform_indices = @transform_3, window_bounds = array<i64: 1, 2, 128>}]} {
    %c0 = arith.constant 0 : index
    %c0_0 = arith.constant 0 : index
    %c0_1 = arith.constant 0 : index
    %0 = vector.load %arg1[%c0, %c0_0, %c0_1] : memref<2x16x128xf32, #tpu.memory_space<vmem>>, vector<2x16x128xf32>
    %1 = vector.shape_cast %0 : vector<2x16x128xf32> to vector<32x128xf32>
    %c1 = arith.constant 1 : index
    %c0_2 = arith.constant 0 : index
    %c0_3 = arith.constant 0 : index
    %2 = vector.load %arg2[%c1, %c0_2, %c0_3] : memref<3x128x128xf32, #tpu.memory_space<vmem>>, vector<1x128x128xf32>
    %3 = vector.shape_cast %2 : vector<1x128x128xf32> to vector<128x128xf32>
    %cst = arith.constant dense<0.000000e+00> : vector<32x128xf32>
    %4 = tpu.matmul %1, %3, %cst {dimension_numbers = #tpu.dot_dimension_numbers<[1], [0], [0], [1], [0, 0, 1, 1], [], []>} : vector<32x128xf32>, vector<128x128xf32>, vector<32x128xf32> -> vector<32x128xf32>
    %c0_4 = arith.constant 0 : index
    %c0_5 = arith.constant 0 : index
    %c0_6 = arith.constant 0 : index
    %5 = vector.load %arg2[%c0_4, %c0_5, %c0_6] : memref<3x128x128xf32, #tpu.memory_space<vmem>>, vector<1x128x128xf32>
    %6 = vector.shape_cast %5 : vector<1x128x128xf32> to vector<128x128xf32>
    %cst_7 = arith.constant dense<0.000000e+00> : vector<32x128xf32>
    %7 = tpu.matmul %1, %6, %cst_7 {dimension_numbers = #tpu.dot_dimension_numbers<[1], [0], [0], [1], [0, 0, 1, 1], [], []>} : vector<32x128xf32>, vector<128x128xf32>, vector<32x128xf32> -> vector<32x128xf32>
    %c2 = arith.constant 2 : index
    %c0_8 = arith.constant 0 : index
    %c0_9 = arith.constant 0 : index
    %8 = vector.load %arg2[%c2, %c0_8, %c0_9] : memref<3x128x128xf32, #tpu.memory_space<vmem>>, vector<1x128x128xf32>
    %9 = vector.shape_cast %8 : vector<1x128x128xf32> to vector<128x128xf32>
    %cst_10 = arith.constant dense<0.000000e+00> : vector<32x128xf32>
    %10 = tpu.matmul %1, %9, %cst_10 {dimension_numbers = #tpu.dot_dimension_numbers<[1], [0], [0], [1], [0, 0, 1, 1], [], []>} : vector<32x128xf32>, vector<128x128xf32>, vector<32x128xf32> -> vector<32x128xf32>
    %cst_11 = arith.constant 0.000000e+00 : f32
    %11 = vector.broadcast %cst_11 : f32 to vector<1x128xf32>
    %12 = vector.extract_strided_slice %7 {offsets = [0, 0], sizes = [31, 128], strides = [1, 1]} : vector<32x128xf32> to vector<31x128xf32>
    %13 = tpu.concatenate %11, %12 in 0 : vector<1x128xf32>, vector<31x128xf32> -> vector<32x128xf32>
    %14 = vector.extract_strided_slice %10 {offsets = [1, 0], sizes = [31, 128], strides = [1, 1]} : vector<32x128xf32> to vector<31x128xf32>
    %15 = tpu.concatenate %14, %11 in 0 : vector<31x128xf32>, vector<1x128xf32> -> vector<32x128xf32>
    %16 = tpu.iota {dimensions = array<i32: 0>} : vector<32x128xi32>
    %c16_i32 = arith.constant 16 : i32
    %c0_i32 = arith.constant 0 : i32
    %17 = arith.cmpi eq, %c16_i32, %c0_i32 : i32
    %c1_i32 = arith.constant 1 : i32
    %18 = arith.select %17, %c1_i32, %c16_i32 : i32
    %19 = vector.broadcast %18 : i32 to vector<32x128xi32>
    %20 = arith.remsi %16, %19 : vector<32x128xi32>
    %c0_i32_12 = arith.constant 0 : i32
    %21 = vector.broadcast %c0_i32_12 : i32 to vector<32x128xi32>
    %22 = arith.cmpi ne, %20, %21 : vector<32x128xi32>
    %c0_i32_13 = arith.constant 0 : i32
    %23 = vector.broadcast %c0_i32_13 : i32 to vector<32x128xi32>
    %24 = arith.cmpi slt, %20, %23 : vector<32x128xi32>
    %c0_i32_14 = arith.constant 0 : i32
    %25 = arith.cmpi slt, %18, %c0_i32_14 : i32
    %26 = vector.broadcast %25 : i1 to vector<32x128xi1>
    %27 = vector.broadcast %26 : vector<32x128xi1> to vector<32x128xi1>
    %28 = arith.xori %24, %27 : vector<32x128xi1>
    %29 = arith.andi %28, %22 : vector<32x128xi1>
    %30 = vector.broadcast %18 : i32 to vector<32x128xi32>
    %31 = arith.addi %20, %30 : vector<32x128xi32>
    %32 = arith.select %29, %31, %20 : vector<32x128xi1>, vector<32x128xi32>
    %c0_i32_15 = arith.constant 0 : i32
    %33 = vector.broadcast %c0_i32_15 : i32 to vector<32x128xi32>
    %34 = arith.cmpi ne, %32, %33 : vector<32x128xi32>
    %cst_16 = arith.constant 0.000000e+00 : f32
    %35 = vector.broadcast %cst_16 : f32 to vector<32x128xf32>
    %36 = arith.select %34, %13, %35 : vector<32x128xi1>, vector<32x128xf32>
    %c15_i32 = arith.constant 15 : i32
    %37 = vector.broadcast %c15_i32 : i32 to vector<32x128xi32>
    %38 = arith.cmpi ne, %32, %37 : vector<32x128xi32>
    %cst_17 = arith.constant 0.000000e+00 : f32
    %39 = vector.broadcast %cst_17 : f32 to vector<32x128xf32>
    %40 = arith.select %38, %15, %39 : vector<32x128xi1>, vector<32x128xf32>
    %41 = arith.addf %4, %36 : vector<32x128xf32>
    %42 = arith.addf %41, %40 : vector<32x128xf32>
    %43 = vector.shape_cast %42 : vector<32x128xf32> to vector<2x16x128xf32>
    %c0_18 = arith.constant 0 : index
    %c0_19 = arith.constant 0 : index
    %c0_20 = arith.constant 0 : index
    %44 = vector.load %arg3[%c0_18, %c0_19, %c0_20] : memref<2x16x128xf32, #tpu.memory_space<vmem>>, vector<2x16x128xf32>
    tpu.vector_store %arg3[%c0_18, %c0_19, %c0_20], %43 {strides = array<i32>} : memref<2x16x128xf32, #tpu.memory_space<vmem>>, vector<2x16x128xf32>,
    %cst_21 = arith.constant dense<0.000000e+00> : vector<128xf32>
    %45 = vector.multi_reduction <add>, %42, %cst_21 [0] : vector<32x128xf32> to vector<128xf32>
    %46 = vector.shape_cast %45 : vector<128xf32> to vector<1x128xf32>
    %47 = vector.shape_cast %46 : vector<1x128xf32> to vector<1x1x128xf32>
    %c0_22 = arith.constant 0 : index
    %c0_23 = arith.constant 0 : index
    %c0_24 = arith.constant 0 : index
    %48 = vector.load %arg4[%c0_22, %c0_23, %c0_24] : memref<1x2x128xf32, #tpu.memory_space<vmem>>, vector<1x1x128xf32>
    tpu.vector_store %arg4[%c0_22, %c0_23, %c0_24], %47 {strides = array<i32>} : memref<1x2x128xf32, #tpu.memory_space<vmem>>, vector<1x1x128xf32>,
    %49 = arith.mulf %42, %42 : vector<32x128xf32>
    %cst_25 = arith.constant dense<0.000000e+00> : vector<128xf32>
    %50 = vector.multi_reduction <add>, %49, %cst_25 [0] : vector<32x128xf32> to vector<128xf32>
    %51 = vector.shape_cast %50 : vector<128xf32> to vector<1x128xf32>
    %52 = vector.shape_cast %51 : vector<1x128xf32> to vector<1x1x128xf32>
    %c0_26 = arith.constant 0 : index
    %c1_27 = arith.constant 1 : index
    %c0_28 = arith.constant 0 : index
    %53 = vector.load %arg4[%c0_26, %c1_27, %c0_28] : memref<1x2x128xf32, #tpu.memory_space<vmem>>, vector<1x1x128xf32>
    tpu.vector_store %arg4[%c0_26, %c1_27, %c0_28], %52 {strides = array<i32>} : memref<1x2x128xf32, #tpu.memory_space<vmem>>, vector<1x1x128xf32>,
    return
  }
  func.func @transform_0(%arg0: i32) -> (i32, i32, i32) {
    %c0_i32 = arith.constant 0 : i32
    %c0_i32_0 = arith.constant 0 : i32
    %c0_i32_1 = arith.constant 0 : i32
    return %arg0, %c0_i32, %c0_i32_0 : i32, i32, i32
  }
  func.func @transform_1(%arg0: i32) -> (i32, i32, i32) {
    %c0_i32 = arith.constant 0 : i32
    %c0_i32_0 = arith.constant 0 : i32
    %c0_i32_1 = arith.constant 0 : i32
    %c0_i32_2 = arith.constant 0 : i32
    return %c0_i32, %c0_i32_0, %c0_i32_1 : i32, i32, i32
  }
  func.func @transform_2(%arg0: i32) -> (i32, i32, i32) {
    %c0_i32 = arith.constant 0 : i32
    %c0_i32_0 = arith.constant 0 : i32
    %c0_i32_1 = arith.constant 0 : i32
    return %arg0, %c0_i32, %c0_i32_0 : i32, i32, i32
  }
  func.func @transform_3(%arg0: i32) -> (i32, i32, i32) {
    %c0_i32 = arith.constant 0 : i32
    %c0_i32_0 = arith.constant 0 : i32
    %c0_i32_1 = arith.constant 0 : i32
    return %arg0, %c0_i32, %c0_i32_0 : i32, i32, i32
  }
}

module attributes {stable_mosaic.version = 11 : i64} {
  func.func @bn1_relu_conv2_stats_kernel(%arg0: i32, %arg1: memref<2x16x128xf32, #tpu.memory_space<vmem>>, %arg2: memref<1x128xf32, #tpu.memory_space<vmem>>, %arg3: memref<1x128xf32, #tpu.memory_space<vmem>>, %arg4: memref<3x128x128xf32, #tpu.memory_space<vmem>>, %arg5: memref<2x16x128xf32, #tpu.memory_space<vmem>>, %arg6: memref<1x2x128xf32, #tpu.memory_space<vmem>>) attributes {dimension_semantics = [#tpu.dimension_semantics<parallel>], iteration_bounds = array<i64: 1>, scalar_prefetch = 0 : i64, scratch_operands = 0 : i64, tpu.core_type = #tpu.core_type<tc>, window_params = [{transform_indices = @transform_0, window_bounds = array<i64: 2, 16, 128>}, {pipeline_mode = #tpu.pipeline_mode<synchronous>, transform_indices = @transform_1, window_bounds = array<i64: 1, 128>}, {pipeline_mode = #tpu.pipeline_mode<synchronous>, transform_indices = @transform_2, window_bounds = array<i64: 1, 128>}, {pipeline_mode = #tpu.pipeline_mode<synchronous>, transform_indices = @transform_3, window_bounds = array<i64: 3, 128, 128>}, {transform_indices = @transform_4, window_bounds = array<i64: 2, 16, 128>}, {transform_indices = @transform_5, window_bounds = array<i64: 1, 2, 128>}]} {
    %c0 = arith.constant 0 : index
    %c0_0 = arith.constant 0 : index
    %c0_1 = arith.constant 0 : index
    %0 = vector.load %arg1[%c0, %c0_0, %c0_1] : memref<2x16x128xf32, #tpu.memory_space<vmem>>, vector<2x16x128xf32>
    %1 = vector.shape_cast %0 : vector<2x16x128xf32> to vector<32x128xf32>
    %c0_2 = arith.constant 0 : index
    %c0_3 = arith.constant 0 : index
    %2 = vector.load %arg2[%c0_2, %c0_3] : memref<1x128xf32, #tpu.memory_space<vmem>>, vector<1x128xf32>
    %3 = vector.broadcast %2 : vector<1x128xf32> to vector<32x128xf32>
    %4 = arith.mulf %1, %3 : vector<32x128xf32>
    %c0_4 = arith.constant 0 : index
    %c0_5 = arith.constant 0 : index
    %5 = vector.load %arg3[%c0_4, %c0_5] : memref<1x128xf32, #tpu.memory_space<vmem>>, vector<1x128xf32>
    %6 = vector.broadcast %5 : vector<1x128xf32> to vector<32x128xf32>
    %7 = arith.addf %4, %6 : vector<32x128xf32>
    %cst = arith.constant 0.000000e+00 : f32
    %8 = vector.broadcast %cst : f32 to vector<32x128xf32>
    %9 = arith.maximumf %7, %8 : vector<32x128xf32>
    %c1 = arith.constant 1 : index
    %c0_6 = arith.constant 0 : index
    %c0_7 = arith.constant 0 : index
    %10 = vector.load %arg4[%c1, %c0_6, %c0_7] : memref<3x128x128xf32, #tpu.memory_space<vmem>>, vector<1x128x128xf32>
    %11 = vector.shape_cast %10 : vector<1x128x128xf32> to vector<128x128xf32>
    %cst_8 = arith.constant dense<0.000000e+00> : vector<32x128xf32>
    %12 = tpu.matmul %9, %11, %cst_8 {dimension_numbers = #tpu.dot_dimension_numbers<[1], [0], [0], [1], [0, 0, 1, 1], [], []>} : vector<32x128xf32>, vector<128x128xf32>, vector<32x128xf32> -> vector<32x128xf32>
    %c0_9 = arith.constant 0 : index
    %c0_10 = arith.constant 0 : index
    %c0_11 = arith.constant 0 : index
    %13 = vector.load %arg4[%c0_9, %c0_10, %c0_11] : memref<3x128x128xf32, #tpu.memory_space<vmem>>, vector<1x128x128xf32>
    %14 = vector.shape_cast %13 : vector<1x128x128xf32> to vector<128x128xf32>
    %cst_12 = arith.constant dense<0.000000e+00> : vector<32x128xf32>
    %15 = tpu.matmul %9, %14, %cst_12 {dimension_numbers = #tpu.dot_dimension_numbers<[1], [0], [0], [1], [0, 0, 1, 1], [], []>} : vector<32x128xf32>, vector<128x128xf32>, vector<32x128xf32> -> vector<32x128xf32>
    %c2 = arith.constant 2 : index
    %c0_13 = arith.constant 0 : index
    %c0_14 = arith.constant 0 : index
    %16 = vector.load %arg4[%c2, %c0_13, %c0_14] : memref<3x128x128xf32, #tpu.memory_space<vmem>>, vector<1x128x128xf32>
    %17 = vector.shape_cast %16 : vector<1x128x128xf32> to vector<128x128xf32>
    %cst_15 = arith.constant dense<0.000000e+00> : vector<32x128xf32>
    %18 = tpu.matmul %9, %17, %cst_15 {dimension_numbers = #tpu.dot_dimension_numbers<[1], [0], [0], [1], [0, 0, 1, 1], [], []>} : vector<32x128xf32>, vector<128x128xf32>, vector<32x128xf32> -> vector<32x128xf32>
    %cst_16 = arith.constant 0.000000e+00 : f32
    %19 = vector.broadcast %cst_16 : f32 to vector<1x128xf32>
    %20 = vector.extract_strided_slice %15 {offsets = [0, 0], sizes = [31, 128], strides = [1, 1]} : vector<32x128xf32> to vector<31x128xf32>
    %21 = tpu.concatenate %19, %20 in 0 : vector<1x128xf32>, vector<31x128xf32> -> vector<32x128xf32>
    %22 = vector.extract_strided_slice %18 {offsets = [1, 0], sizes = [31, 128], strides = [1, 1]} : vector<32x128xf32> to vector<31x128xf32>
    %23 = tpu.concatenate %22, %19 in 0 : vector<31x128xf32>, vector<1x128xf32> -> vector<32x128xf32>
    %24 = tpu.iota {dimensions = array<i32: 0>} : vector<32x128xi32>
    %c16_i32 = arith.constant 16 : i32
    %c0_i32 = arith.constant 0 : i32
    %25 = arith.cmpi eq, %c16_i32, %c0_i32 : i32
    %c1_i32 = arith.constant 1 : i32
    %26 = arith.select %25, %c1_i32, %c16_i32 : i32
    %27 = vector.broadcast %26 : i32 to vector<32x128xi32>
    %28 = arith.remsi %24, %27 : vector<32x128xi32>
    %c0_i32_17 = arith.constant 0 : i32
    %29 = vector.broadcast %c0_i32_17 : i32 to vector<32x128xi32>
    %30 = arith.cmpi ne, %28, %29 : vector<32x128xi32>
    %c0_i32_18 = arith.constant 0 : i32
    %31 = vector.broadcast %c0_i32_18 : i32 to vector<32x128xi32>
    %32 = arith.cmpi slt, %28, %31 : vector<32x128xi32>
    %c0_i32_19 = arith.constant 0 : i32
    %33 = arith.cmpi slt, %26, %c0_i32_19 : i32
    %34 = vector.broadcast %33 : i1 to vector<32x128xi1>
    %35 = vector.broadcast %34 : vector<32x128xi1> to vector<32x128xi1>
    %36 = arith.xori %32, %35 : vector<32x128xi1>
    %37 = arith.andi %36, %30 : vector<32x128xi1>
    %38 = vector.broadcast %26 : i32 to vector<32x128xi32>
    %39 = arith.addi %28, %38 : vector<32x128xi32>
    %40 = arith.select %37, %39, %28 : vector<32x128xi1>, vector<32x128xi32>
    %c0_i32_20 = arith.constant 0 : i32
    %41 = vector.broadcast %c0_i32_20 : i32 to vector<32x128xi32>
    %42 = arith.cmpi ne, %40, %41 : vector<32x128xi32>
    %cst_21 = arith.constant 0.000000e+00 : f32
    %43 = vector.broadcast %cst_21 : f32 to vector<32x128xf32>
    %44 = arith.select %42, %21, %43 : vector<32x128xi1>, vector<32x128xf32>
    %c15_i32 = arith.constant 15 : i32
    %45 = vector.broadcast %c15_i32 : i32 to vector<32x128xi32>
    %46 = arith.cmpi ne, %40, %45 : vector<32x128xi32>
    %cst_22 = arith.constant 0.000000e+00 : f32
    %47 = vector.broadcast %cst_22 : f32 to vector<32x128xf32>
    %48 = arith.select %46, %23, %47 : vector<32x128xi1>, vector<32x128xf32>
    %49 = arith.addf %12, %44 : vector<32x128xf32>
    %50 = arith.addf %49, %48 : vector<32x128xf32>
    %51 = vector.shape_cast %50 : vector<32x128xf32> to vector<2x16x128xf32>
    %c0_23 = arith.constant 0 : index
    %c0_24 = arith.constant 0 : index
    %c0_25 = arith.constant 0 : index
    %52 = vector.load %arg5[%c0_23, %c0_24, %c0_25] : memref<2x16x128xf32, #tpu.memory_space<vmem>>, vector<2x16x128xf32>
    tpu.vector_store %arg5[%c0_23, %c0_24, %c0_25], %51 {strides = array<i32>} : memref<2x16x128xf32, #tpu.memory_space<vmem>>, vector<2x16x128xf32>,
    %cst_26 = arith.constant dense<0.000000e+00> : vector<128xf32>
    %53 = vector.multi_reduction <add>, %50, %cst_26 [0] : vector<32x128xf32> to vector<128xf32>
    %54 = vector.shape_cast %53 : vector<128xf32> to vector<1x128xf32>
    %55 = vector.shape_cast %54 : vector<1x128xf32> to vector<1x1x128xf32>
    %c0_27 = arith.constant 0 : index
    %c0_28 = arith.constant 0 : index
    %c0_29 = arith.constant 0 : index
    %56 = vector.load %arg6[%c0_27, %c0_28, %c0_29] : memref<1x2x128xf32, #tpu.memory_space<vmem>>, vector<1x1x128xf32>
    tpu.vector_store %arg6[%c0_27, %c0_28, %c0_29], %55 {strides = array<i32>} : memref<1x2x128xf32, #tpu.memory_space<vmem>>, vector<1x1x128xf32>,
    %57 = arith.mulf %50, %50 : vector<32x128xf32>
    %cst_30 = arith.constant dense<0.000000e+00> : vector<128xf32>
    %58 = vector.multi_reduction <add>, %57, %cst_30 [0] : vector<32x128xf32> to vector<128xf32>
    %59 = vector.shape_cast %58 : vector<128xf32> to vector<1x128xf32>
    %60 = vector.shape_cast %59 : vector<1x128xf32> to vector<1x1x128xf32>
    %c0_31 = arith.constant 0 : index
    %c1_32 = arith.constant 1 : index
    %c0_33 = arith.constant 0 : index
    %61 = vector.load %arg6[%c0_31, %c1_32, %c0_33] : memref<1x2x128xf32, #tpu.memory_space<vmem>>, vector<1x1x128xf32>
    tpu.vector_store %arg6[%c0_31, %c1_32, %c0_33], %60 {strides = array<i32>} : memref<1x2x128xf32, #tpu.memory_space<vmem>>, vector<1x1x128xf32>,
    return
  }
  func.func @transform_0(%arg0: i32) -> (i32, i32, i32) {
    %c0_i32 = arith.constant 0 : i32
    %c0_i32_0 = arith.constant 0 : i32
    %c0_i32_1 = arith.constant 0 : i32
    return %arg0, %c0_i32, %c0_i32_0 : i32, i32, i32
  }
  func.func @transform_1(%arg0: i32) -> (i32, i32) {
    %c0_i32 = arith.constant 0 : i32
    %c0_i32_0 = arith.constant 0 : i32
    %c0_i32_1 = arith.constant 0 : i32
    return %c0_i32, %c0_i32_0 : i32, i32
  }
  func.func @transform_2(%arg0: i32) -> (i32, i32) {
    %c0_i32 = arith.constant 0 : i32
    %c0_i32_0 = arith.constant 0 : i32
    %c0_i32_1 = arith.constant 0 : i32
    return %c0_i32, %c0_i32_0 : i32, i32
  }
  func.func @transform_3(%arg0: i32) -> (i32, i32, i32) {
    %c0_i32 = arith.constant 0 : i32
    %c0_i32_0 = arith.constant 0 : i32
    %c0_i32_1 = arith.constant 0 : i32
    %c0_i32_2 = arith.constant 0 : i32
    return %c0_i32, %c0_i32_0, %c0_i32_1 : i32, i32, i32
  }
  func.func @transform_4(%arg0: i32) -> (i32, i32, i32) {
    %c0_i32 = arith.constant 0 : i32
    %c0_i32_0 = arith.constant 0 : i32
    %c0_i32_1 = arith.constant 0 : i32
    return %arg0, %c0_i32, %c0_i32_0 : i32, i32, i32
  }
  func.func @transform_5(%arg0: i32) -> (i32, i32, i32) {
    %c0_i32 = arith.constant 0 : i32
    %c0_i32_0 = arith.constant 0 : i32
    %c0_i32_1 = arith.constant 0 : i32
    return %arg0, %c0_i32, %c0_i32_0 : i32, i32, i32
  }
}

module attributes {stable_mosaic.version = 11 : i64} {
  func.func @bn2_residual_relu_kernel(%arg0: i32, %arg1: memref<2x16x128xf32, #tpu.memory_space<vmem>>, %arg2: memref<1x128xf32, #tpu.memory_space<vmem>>, %arg3: memref<1x128xf32, #tpu.memory_space<vmem>>, %arg4: memref<2x16x128xf32, #tpu.memory_space<vmem>>, %arg5: memref<2x16x128xf32, #tpu.memory_space<vmem>>) attributes {dimension_semantics = [#tpu.dimension_semantics<parallel>], iteration_bounds = array<i64: 1>, scalar_prefetch = 0 : i64, scratch_operands = 0 : i64, tpu.core_type = #tpu.core_type<tc>, window_params = [{transform_indices = @transform_0, window_bounds = array<i64: 2, 16, 128>}, {pipeline_mode = #tpu.pipeline_mode<synchronous>, transform_indices = @transform_1, window_bounds = array<i64: 1, 128>}, {pipeline_mode = #tpu.pipeline_mode<synchronous>, transform_indices = @transform_2, window_bounds = array<i64: 1, 128>}, {transform_indices = @transform_3, window_bounds = array<i64: 2, 16, 128>}, {transform_indices = @transform_4, window_bounds = array<i64: 2, 16, 128>}]} {
    %c0 = arith.constant 0 : index
    %c0_0 = arith.constant 0 : index
    %c0_1 = arith.constant 0 : index
    %0 = vector.load %arg1[%c0, %c0_0, %c0_1] : memref<2x16x128xf32, #tpu.memory_space<vmem>>, vector<2x16x128xf32>
    %1 = vector.shape_cast %0 : vector<2x16x128xf32> to vector<32x128xf32>
    %c0_2 = arith.constant 0 : index
    %c0_3 = arith.constant 0 : index
    %2 = vector.load %arg2[%c0_2, %c0_3] : memref<1x128xf32, #tpu.memory_space<vmem>>, vector<1x128xf32>
    %3 = vector.broadcast %2 : vector<1x128xf32> to vector<32x128xf32>
    %4 = arith.mulf %1, %3 : vector<32x128xf32>
    %c0_4 = arith.constant 0 : index
    %c0_5 = arith.constant 0 : index
    %5 = vector.load %arg3[%c0_4, %c0_5] : memref<1x128xf32, #tpu.memory_space<vmem>>, vector<1x128xf32>
    %6 = vector.broadcast %5 : vector<1x128xf32> to vector<32x128xf32>
    %7 = arith.addf %4, %6 : vector<32x128xf32>
    %c0_6 = arith.constant 0 : index
    %c0_7 = arith.constant 0 : index
    %c0_8 = arith.constant 0 : index
    %8 = vector.load %arg4[%c0_6, %c0_7, %c0_8] : memref<2x16x128xf32, #tpu.memory_space<vmem>>, vector<2x16x128xf32>
    %9 = vector.shape_cast %8 : vector<2x16x128xf32> to vector<32x128xf32>
    %10 = arith.addf %7, %9 : vector<32x128xf32>
    %cst = arith.constant 0.000000e+00 : f32
    %11 = vector.broadcast %cst : f32 to vector<32x128xf32>
    %12 = arith.maximumf %10, %11 : vector<32x128xf32>
    %13 = vector.shape_cast %12 : vector<32x128xf32> to vector<2x16x128xf32>
    %c0_9 = arith.constant 0 : index
    %c0_10 = arith.constant 0 : index
    %c0_11 = arith.constant 0 : index
    %14 = vector.load %arg5[%c0_9, %c0_10, %c0_11] : memref<2x16x128xf32, #tpu.memory_space<vmem>>, vector<2x16x128xf32>
    tpu.vector_store %arg5[%c0_9, %c0_10, %c0_11], %13 {strides = array<i32>} : memref<2x16x128xf32, #tpu.memory_space<vmem>>, vector<2x16x128xf32>,
    return
  }
  func.func @transform_0(%arg0: i32) -> (i32, i32, i32) {
    %c0_i32 = arith.constant 0 : i32
    %c0_i32_0 = arith.constant 0 : i32
    %c0_i32_1 = arith.constant 0 : i32
    return %arg0, %c0_i32, %c0_i32_0 : i32, i32, i32
  }
  func.func @transform_1(%arg0: i32) -> (i32, i32) {
    %c0_i32 = arith.constant 0 : i32
    %c0_i32_0 = arith.constant 0 : i32
    %c0_i32_1 = arith.constant 0 : i32
    return %c0_i32, %c0_i32_0 : i32, i32
  }
  func.func @transform_2(%arg0: i32) -> (i32, i32) {
    %c0_i32 = arith.constant 0 : i32
    %c0_i32_0 = arith.constant 0 : i32
    %c0_i32_1 = arith.constant 0 : i32
    return %c0_i32, %c0_i32_0 : i32, i32
  }
  func.func @transform_3(%arg0: i32) -> (i32, i32, i32) {
    %c0_i32 = arith.constant 0 : i32
    %c0_i32_0 = arith.constant 0 : i32
    %c0_i32_1 = arith.constant 0 : i32
    return %arg0, %c0_i32, %c0_i32_0 : i32, i32, i32
  }
  func.func @transform_4(%arg0: i32) -> (i32, i32, i32) {
    %c0_i32 = arith.constant 0 : i32
    %c0_i32_0 = arith.constant 0 : i32
    %c0_i32_1 = arith.constant 0 : i32
    return %arg0, %c0_i32, %c0_i32_0 : i32, i32, i32
  }
}

</mosaic_0001>

<llo_original>
// kernel: basic_block_forward.5
$region0: #{basic_block_forward.5}
  #allocation0 [shape = 'u32[]', space=smem, size = 0x4, offset = 0x4, fixed_abs, tag = 'smem constant byte address 0x4 - core index']
  #allocation1 [shape = 'u32[144,128]{1,0:T(1,128)}', space=vmem, size = 0x12000, scoped, tag = 'internal scratch']
  %s0 = inlined_call_operand.vmem [shape: f32[2,16,128], index: 0, kind: input, shape index: {}]
  %s1 = inlined_call_operand.vmem [shape: f32[1,128], index: 1, kind: input, shape index: {}]
  %s2 = inlined_call_operand.vmem [shape: f32[1,128], index: 2, kind: input, shape index: {}]
  %s3 = inlined_call_operand.vmem [shape: f32[2,16,128], index: 3, kind: input, shape index: {}]
  %s4 = inlined_call_operand.vmem [shape: f32[2,16,128], index: 4, kind: output, shape index: {}]
  %s5 = sld [smem:[#allocation0]]
  $region26: #{basic_block_forward.5} parent=0
    _
  %s7 = ssub.s32 1, %s5
  %s8 = scalar_select 0, %s7, %s5
  // Predicated region
  $region2: #{basic_block_forward.5} parent=0 // pred_check
    _
  $region3: #{basic_block_forward.5} parent=0 // pred_check_branch
    %10 = sbr.rel (0) target = $region5
  $region4: #{basic_block_forward.5} parent=0 // pred_region
    _
  $region5: #{basic_block_forward.5} parent=0 // pred_fallthru
    _
  // Predicated region
  $region6: #{basic_block_forward.5} parent=0 // pred_check
    _
  $region7: #{basic_block_forward.5} parent=0 // pred_check_branch
    %12 = sbr.rel (0) target = $region9
  $region8: #{basic_block_forward.5} parent=0 // pred_region
    _
  $region9: #{basic_block_forward.5} parent=0 // pred_fallthru
    _
  // Predicated region
  $region10: #{basic_block_forward.5} parent=0 // pred_check
    _
  $region11: #{basic_block_forward.5} parent=0 // pred_check_branch
    %14 = sbr.rel (0) target = $region13
  $region12: #{basic_block_forward.5} parent=0 // pred_region
    _
  $region13: #{basic_block_forward.5} parent=0 // pred_fallthru
    _
  // Predicated region
  $region14: #{basic_block_forward.5} parent=0 // pred_check
    _
  $region15: #{basic_block_forward.5} parent=0 // pred_check_branch
    %16 = sbr.rel (0) target = $region17
  $region16: #{basic_block_forward.5} parent=0 // pred_region
    _
  $region17: #{basic_block_forward.5} parent=0 // pred_fallthru
    _
  %v17 = vld [vmem:[%s0] sm:$0xff]
  %v18 = vld [vmem:[%s0 + $0x8] sm:$0xff]
  %v19 = vld [vmem:[%s0 + $0x10] sm:$0xff]
  %v20 = vld [vmem:[%s0 + $0x18] sm:$0xff]
  %v21 = vld [vmem:[%s1] sm:$0x1]
  %v23 = vlaneseq
  %v24 = vshrl.u32 %v23, 7
  %v25 = vsub.s32 0, %v24
  %v26 = vrot.slane %v21, %v25
  %v28 = vmul.f32 %v17, %v26
  %v29 = vmul.f32 %v18, %v26
  %v30 = vmul.f32 %v19, %v26
  %v31 = vmul.f32 %v20, %v26
  %v32 = vld [vmem:[%s2] sm:$0x1]
  %v34 = vlaneseq
  %v35 = vshrl.u32 %v34, 7
  %v36 = vsub.s32 0, %v35
  %v37 = vrot.slane %v32, %v36
  %v39 = vadd.f32 %v28, %v37
  %v40 = vadd.f32 %v29, %v37
  %v41 = vadd.f32 %v30, %v37
  %v42 = vadd.f32 %v31, %v37
  %v43 = vld [vmem:[%s3] sm:$0xff]
  %v44 = vld [vmem:[%s3 + $0x8] sm:$0xff]
  %v45 = vld [vmem:[%s3 + $0x10] sm:$0xff]
  %v46 = vld [vmem:[%s3 + $0x18] sm:$0xff]
  %v47 = vadd.f32 %v39, %v43
  %v48 = vadd.f32 %v40, %v44
  %v49 = vadd.f32 %v41, %v45
  %v50 = vadd.f32 %v42, %v46
  %v51 = vmax.f32 %v47, 0.0
  %v52 = vmax.f32 %v48, 0.0
  %v53 = vmax.f32 %v49, 0.0
  %v54 = vmax.f32 %v50, 0.0
  %55 = vst [vmem:[%s4] sm:$0xff] %v51
  %56 = vst [vmem:[%s4 + $0x8] sm:$0xff] %v52
  %57 = vst [vmem:[%s4 + $0x10] sm:$0xff] %v53
  %58 = vst [vmem:[%s4 + $0x18] sm:$0xff] %v54
  // Predicated region
  $region18: #{basic_block_forward.5} parent=0 // pred_check
    _
  $region19: #{basic_block_forward.5} parent=0 // pred_check_branch
    %60 = sbr.rel (0) target = $region21
  $region20: #{basic_block_forward.5} parent=0 // pred_region
    _
  $region21: #{basic_block_forward.5} parent=0 // pred_fallthru
    _
  // Predicated region
  $region22: #{basic_block_forward.5} parent=0 // pred_check
    _
  $region23: #{basic_block_forward.5} parent=0 // pred_check_branch
    %62 = sbr.rel (0) target = $region25
  $region24: #{basic_block_forward.5} parent=0 // pred_region
    _
  $region25: #{basic_block_forward.5} parent=0 // pred_fallthru
    _

// kernel: basic_block_forward.3
$region0: #{basic_block_forward.3}
  #allocation0 [shape = 'u32[]', space=smem, size = 0x4, offset = 0x4, fixed_abs, tag = 'smem constant byte address 0x4 - core index']
  #allocation1 [shape = 'u32[144,128]{1,0:T(1,128)}', space=vmem, size = 0x12000, scoped, tag = 'internal scratch']
  %s0 = inlined_call_operand.vmem [shape: f32[2,16,128], index: 0, kind: input, shape index: {}]
  %s1 = inlined_call_operand.vmem [shape: f32[3,128,128], index: 1, kind: input, shape index: {}]
  %s2 = inlined_call_operand.vmem [shape: f32[2,16,128], index: 2, kind: output, shape index: {0}]
  %s3 = inlined_call_operand.vmem [shape: f32[1,2,128], index: 3, kind: output, shape index: {1}]
  %4 = xla_tuple %s2, %s3
  %s5 = sld [smem:[#allocation0]]
  $region26: #{basic_block_forward.3} parent=0
    _
  %s7 = ssub.s32 1, %s5
  %s8 = scalar_select 0, %s7, %s5
  // Predicated region
  $region2: #{basic_block_forward.3} parent=0 // pred_check
    _
  $region3: #{basic_block_forward.3} parent=0 // pred_check_branch
    %10 = sbr.rel (0) target = $region5
  $region4: #{basic_block_forward.3} parent=0 // pred_region
    _
  $region5: #{basic_block_forward.3} parent=0 // pred_fallthru
    _
  // Predicated region
  $region6: #{basic_block_forward.3} parent=0 // pred_check
    _
  $region7: #{basic_block_forward.3} parent=0 // pred_check_branch
    %12 = sbr.rel (0) target = $region9
  $region8: #{basic_block_forward.3} parent=0 // pred_region
    _
  $region9: #{basic_block_forward.3} parent=0 // pred_fallthru
    _
  %v13 = vld [vmem:[%s0] sm:$0xff]
  %v14 = vld [vmem:[%s0 + $0x8] sm:$0xff]
  %v15 = vld [vmem:[%s0 + $0x10] sm:$0xff]
  %v16 = vld [vmem:[%s0 + $0x18] sm:$0xff]
  %s17 = scalar_lea.vmem %s1, 128
  %v18 = vld [vmem:[%s17] sm:$0xff]
  %v19 = vld [vmem:[%s17 + $0x8] sm:$0xff]
  %v20 = vld [vmem:[%s17 + $0x10] sm:$0xff]
  %v21 = vld [vmem:[%s17 + $0x18] sm:$0xff]
  %v22 = vld [vmem:[%s17 + $0x20] sm:$0xff]
  %v23 = vld [vmem:[%s17 + $0x28] sm:$0xff]
  %v24 = vld [vmem:[%s17 + $0x30] sm:$0xff]
  %v25 = vld [vmem:[%s17 + $0x38] sm:$0xff]
  %v26 = vld [vmem:[%s17 + $0x40] sm:$0xff]
  %v27 = vld [vmem:[%s17 + $0x48] sm:$0xff]
  %v28 = vld [vmem:[%s17 + $0x50] sm:$0xff]
  %v29 = vld [vmem:[%s17 + $0x58] sm:$0xff]
  %v30 = vld [vmem:[%s17 + $0x60] sm:$0xff]
  %v31 = vld [vmem:[%s17 + $0x68] sm:$0xff]
  %v32 = vld [vmem:[%s17 + $0x70] sm:$0xff]
  %v33 = vld [vmem:[%s17 + $0x78] sm:$0xff]
  %v34 = vld [vmem:[%s1] sm:$0xff]
  %v35 = vld [vmem:[%s1 + $0x8] sm:$0xff]
  %v36 = vld [vmem:[%s1 + $0x10] sm:$0xff]
  %v37 = vld [vmem:[%s1 + $0x18] sm:$0xff]
  %v38 = vld [vmem:[%s1 + $0x20] sm:$0xff]
  %v39 = vld [vmem:[%s1 + $0x28] sm:$0xff]
  %v40 = vld [vmem:[%s1 + $0x30] sm:$0xff]
  %v41 = vld [vmem:[%s1 + $0x38] sm:$0xff]
  %v42 = vld [vmem:[%s1 + $0x40] sm:$0xff]
  %v43 = vld [vmem:[%s1 + $0x48] sm:$0xff]
  %v44 = vld [vmem:[%s1 + $0x50] sm:$0xff]
  %v45 = vld [vmem:[%s1 + $0x58] sm:$0xff]
  %v46 = vld [vmem:[%s1 + $0x60] sm:$0xff]
  %v47 = vld [vmem:[%s1 + $0x68] sm:$0xff]
  %v48 = vld [vmem:[%s1 + $0x70] sm:$0xff]
  %v49 = vld [vmem:[%s1 + $0x78] sm:$0xff]
  %50 = vmatprep.subr.mxu0 0.0
  %51 = vmatpush1.msra.mxu0 %v34
  %52 = vmatprep.subr.mxu0 0.0
  %53 = vmatpush1.msra.mxu0 %v35
  %54 = vmatprep.subr.mxu0 0.0
  %55 = vmatpush1.msra.mxu0 %v36
  %56 = vmatprep.subr.mxu0 0.0
  %57 = vmatpush1.msra.mxu0 %v37
  %58 = vmatprep.subr.mxu0 0.0
  %59 = vmatpush1.msra.mxu0 %v38
  %60 = vmatprep.subr.mxu0 0.0
  %61 = vmatpush1.msra.mxu0 %v39
  %62 = vmatprep.subr.mxu0 0.0
  %63 = vmatpush1.msra.mxu0 %v40
  %64 = vmatprep.subr.mxu0 0.0
  %65 = vmatpush1.msra.mxu0 %v41
  %66 = vmatprep.subr.mxu0 0.0
  %67 = vmatpush1.msra.mxu0 %v42
  %68 = vmatprep.subr.mxu0 0.0
  %69 = vmatpush1.msra.mxu0 %v43
  %70 = vmatprep.subr.mxu0 0.0
  %71 = vmatpush1.msra.mxu0 %v44
  %72 = vmatprep.subr.mxu0 0.0
  %73 = vmatpush1.msra.mxu0 %v45
  %74 = vmatprep.subr.mxu0 0.0
  %75 = vmatpush1.msra.mxu0 %v46
  %76 = vmatprep.subr.mxu0 0.0
  %77 = vmatpush1.msra.mxu0 %v47
  %78 = vmatprep.subr.mxu0 0.0
  %79 = vmatpush1.msra.mxu0 %v48
  %80 = vmatprep.subr.mxu0 0.0
  %81 = vmatpush1.msra.mxu0 %v49
  %82 = vmatprep.subr.mxu0 0.0
  %83 = vmatpush1.msra.mxu0 0.0
  %84 = vmatprep.subr.mxu0 0.0
  %85 = vmatpush1.msra.mxu0 0.0
  %86 = vmatprep.subr.mxu0 0.0
  %87 = vmatpush1.msra.mxu0 0.0
  %88 = vmatprep.subr.mxu0 0.0
  %89 = vmatpush1.msra.mxu0 0.0
  %90 = vmatprep.subr.mxu0 0.0
  %91 = vmatpush1.msra.mxu0 0.0
  %92 = vmatprep.subr.mxu0 0.0
  %93 = vmatpush1.msra.mxu0 0.0
  %94 = vmatprep.subr.mxu0 0.0
  %95 = vmatpush1.msra.mxu0 0.0
  %96 = vmatprep.subr.mxu0 0.0
  %97 = vmatpush1.msra.mxu0 0.0
  %98 = vmatprep.subr.mxu0 0.0
  %99 = vmatpush1.msra.mxu0 0.0
  %100 = vmatprep.subr.mxu0 0.0
  %101 = vmatpush1.msra.mxu0 0.0
  %102 = vmatprep.subr.mxu0 0.0
  %103 = vmatpush1.msra.mxu0 0.0
  %104 = vmatprep.subr.mxu0 0.0
  %105 = vmatpush1.msra.mxu0 0.0
  %106 = vmatprep.subr.mxu0 0.0
  %107 = vmatpush1.msra.mxu0 0.0
  %108 = vmatprep.subr.mxu0 0.0
  %109 = vmatpush1.msra.mxu0 0.0
  %110 = vmatprep.subr.mxu0 0.0
  %111 = vmatpush1.msra.mxu0 0.0
  %112 = vmatprep.subr.mxu0 0.0
  %113 = vmatpush1.msra.mxu0 0.0
  %114 = vmatprep.mubr.f32.mxu0 0.0
  %115 = vmatmul.mubr.f32.gmra.mrb[0].mxu0 %v13
  %v116 = vpop.f32.mrb[0].mxu0
  %v117 = vadd.f32 0.0, %v116
  %v118 = vpop.f32.mrb[0].mxu0
  %119 = vmatprep.mubr.f32.mxu0 0.0
  %120 = vmatmul.mubr.f32.gmra.mrb[0].mxu0 %v14
  %v121 = vpop.f32.mrb[0].mxu0
  %v122 = vadd.f32 0.0, %v121
  %v123 = vpop.f32.mrb[0].mxu0
  %124 = vmatprep.mubr.f32.mxu0 0.0
  %125 = vmatmul.mubr.f32.gmra.mrb[0].mxu0 %v15
  %v126 = vpop.f32.mrb[0].mxu0
  %v127 = vadd.f32 0.0, %v126
  %v128 = vpop.f32.mrb[0].mxu0
  %129 = vmatprep.mubr.f32.mxu0 0.0
  %130 = vmatmul.mubr.f32.gmra.mrb[0].mxu0 %v16
  %v131 = vpop.f32.mrb[0].mxu0
  %v132 = vadd.f32 0.0, %v131
  %v133 = vpop.f32.mrb[0].mxu0
  %134 = vdwg.mxu0
  %s135 = scalar_lea.vmem %s1, 256
  %v136 = vld [vmem:[%s135] sm:$0xff]
  %v137 = vld [vmem:[%s135 + $0x8] sm:$0xff]
  %v138 = vld [vmem:[%s135 + $0x10] sm:$0xff]
  %v139 = vld [vmem:[%s135 + $0x18] sm:$0xff]
  %v140 = vld [vmem:[%s135 + $0x20] sm:$0xff]
  %v141 = vld [vmem:[%s135 + $0x28] sm:$0xff]
  %v142 = vld [vmem:[%s135 + $0x30] sm:$0xff]
  %v143 = vld [vmem:[%s135 + $0x38] sm:$0xff]
  %v144 = vld [vmem:[%s135 + $0x40] sm:$0xff]
  %v145 = vld [vmem:[%s135 + $0x48] sm:$0xff]
  %v146 = vld [vmem:[%s135 + $0x50] sm:$0xff]
  %v147 = vld [vmem:[%s135 + $0x58] sm:$0xff]
  %v148 = vld [vmem:[%s135 + $0x60] sm:$0xff]
  %v149 = vld [vmem:[%s135 + $0x68] sm:$0xff]
  %v150 = vld [vmem:[%s135 + $0x70] sm:$0xff]
  %v151 = vld [vmem:[%s135 + $0x78] sm:$0xff]
  %152 = vmatprep.subr.mxu0 0.0
  %153 = vmatpush1.msra.mxu0 %v136
  %154 = vmatprep.subr.mxu0 0.0
  %155 = vmatpush1.msra.mxu0 %v137
  %156 = vmatprep.subr.mxu0 0.0
  %157 = vmatpush1.msra.mxu0 %v138
  %158 = vmatprep.subr.mxu0 0.0
  %159 = vmatpush1.msra.mxu0 %v139
  %160 = vmatprep.subr.mxu0 0.0
  %161 = vmatpush1.msra.mxu0 %v140
  %162 = vmatprep.subr.mxu0 0.0
  %163 = vmatpush1.msra.mxu0 %v141
  %164 = vmatprep.subr.mxu0 0.0
  %165 = vmatpush1.msra.mxu0 %v142
  %166 = vmatprep.subr.mxu0 0.0
  %167 = vmatpush1.msra.mxu0 %v143
  %168 = vmatprep.subr.mxu0 0.0
  %169 = vmatpush1.msra.mxu0 %v144
  %170 = vmatprep.subr.mxu0 0.0
  %171 = vmatpush1.msra.mxu0 %v145
  %172 = vmatprep.subr.mxu0 0.0
  %173 = vmatpush1.msra.mxu0 %v146
  %174 = vmatprep.subr.mxu0 0.0
  %175 = vmatpush1.msra.mxu0 %v147
  %176 = vmatprep.subr.mxu0 0.0
  %177 = vmatpush1.msra.mxu0 %v148
  %178 = vmatprep.subr.mxu0 0.0
  %179 = vmatpush1.msra.mxu0 %v149
  %180 = vmatprep.subr.mxu0 0.0
  %181 = vmatpush1.msra.mxu0 %v150
  %182 = vmatprep.subr.mxu0 0.0
  %183 = vmatpush1.msra.mxu0 %v151
  %184 = vmatprep.subr.mxu0 0.0
  %185 = vmatpush1.msra.mxu0 0.0
  %186 = vmatprep.subr.mxu0 0.0
  %187 = vmatpush1.msra.mxu0 0.0
  %188 = vmatprep.subr.mxu0 0.0
  %189 = vmatpush1.msra.mxu0 0.0
  %190 = vmatprep.subr.mxu0 0.0
  %191 = vmatpush1.msra.mxu0 0.0
  %192 = vmatprep.subr.mxu0 0.0
  %193 = vmatpush1.msra.mxu0 0.0
  %194 = vmatprep.subr.mxu0 0.0
  %195 = vmatpush1.msra.mxu0 0.0
  %196 = vmatprep.subr.mxu0 0.0
  %197 = vmatpush1.msra.mxu0 0.0
  %198 = vmatprep.subr.mxu0 0.0
  %199 = vmatpush1.msra.mxu0 0.0
  %200 = vmatprep.subr.mxu0 0.0
  %201 = vmatpush1.msra.mxu0 0.0
  %202 = vmatprep.subr.mxu0 0.0
  %203 = vmatpush1.msra.mxu0 0.0
  %204 = vmatprep.subr.mxu0 0.0
  %205 = vmatpush1.msra.mxu0 0.0
  %206 = vmatprep.subr.mxu0 0.0
  %207 = vmatpush1.msra.mxu0 0.0
  %208 = vmatprep.subr.mxu0 0.0
  %209 = vmatpush1.msra.mxu0 0.0
  %210 = vmatprep.subr.mxu0 0.0
  %211 = vmatpush1.msra.mxu0 0.0
  %212 = vmatprep.subr.mxu0 0.0
  %213 = vmatpush1.msra.mxu0 0.0
  %214 = vmatprep.subr.mxu0 0.0
  %215 = vmatpush1.msra.mxu0 0.0
  %216 = vmatprep.mubr.f32.mxu0 0.0
  %217 = vmatmul.mubr.f32.gmra.mrb[0].mxu0 %v13
  %v218 = vpop.f32.mrb[0].mxu0
  %v219 = vadd.f32 0.0, %v218
  %v220 = vpop.f32.mrb[0].mxu0
  %221 = vmatprep.mubr.f32.mxu0 0.0
  %222 = vmatmul.mubr.f32.gmra.mrb[0].mxu0 %v14
  %v223 = vpop.f32.mrb[0].mxu0
  %v224 = vadd.f32 0.0, %v223
  %v225 = vpop.f32.mrb[0].mxu0
  %226 = vmatprep.mubr.f32.mxu0 0.0
  %227 = vmatmul.mubr.f32.gmra.mrb[0].mxu0 %v15
  %v228 = vpop.f32.mrb[0].mxu0
  %v229 = vadd.f32 0.0, %v228
  %v230 = vpop.f32.mrb[0].mxu0
  %231 = vmatprep.mubr.f32.mxu0 0.0
  %232 = vmatmul.mubr.f32.gmra.mrb[0].mxu0 %v16
  %v233 = vpop.f32.mrb[0].mxu0
  %v234 = vadd.f32 0.0, %v233
  %v235 = vpop.f32.mrb[0].mxu0
  %236 = vdwg.mxu0
  %vm241 = vcmask 1040384
  %v242 = vrot.slane %v117, 7
  %v243 = vrot.slane %v122, 7
  %v244 = vsel %vm241, %v242, %v243
  %v245 = vrot.slane %v127, 7
  %v246 = vsel %vm241, %v243, %v245
  %v247 = vrot.slane %v132, 7
  %v248 = vsel %vm241, %v245, %v247
  %v253 = vsel %vm241, 0.0, %v242
  %vm258 = vcmask 1046528
  %v259 = vrot.slane %v219, 1
  %v260 = vrot.slane %v224, 1
  %v261 = vsel %vm258, %v259, %v260
  %v262 = vrot.slane %v229, 1
  %v263 = vsel %vm258, %v260, %v262
  %v264 = vrot.slane %v234, 1
  %v265 = vsel %vm258, %v262, %v264
  %v270 = vsel %vm258, %v264, 0.0
  %v271 = vlaneseq
  %v272 = vshrl.u32 %v271, 7
  %v273 = vadd.s32 %v272, 8
  %v274 = vadd.s32 %v272, 16
  %v275 = vadd.s32 %v272, 24
  %vm276 = vcmp.lt.s32.totalorder %v272, 0
  %v277 = vsub.s32 0, %v272
  %v278 = vsel %vm276, %v277, %v272
  %v279 = vshrl.u32 %v278, 4
  %v280 = vand.u32 %v278, 15
  %v281 = vsub.s32 0, %v280
  %v282 = vsel %vm276, %v281, %v280
  %vm283 = vcmp.lt.s32.totalorder %v273, 0
  %v284 = vsub.s32 0, %v273
  %v285 = vsel %vm283, %v284, %v273
  %v286 = vshrl.u32 %v285, 4
  %v287 = vand.u32 %v285, 15
  %v288 = vsub.s32 0, %v287
  %v289 = vsel %vm283, %v288, %v287
  %vm290 = vcmp.lt.s32.totalorder %v274, 0
  %v291 = vsub.s32 0, %v274
  %v292 = vsel %vm290, %v291, %v274
  %v293 = vshrl.u32 %v292, 4
  %v294 = vand.u32 %v292, 15
  %v295 = vsub.s32 0, %v294
  %v296 = vsel %vm290, %v295, %v294
  %vm297 = vcmp.lt.s32.totalorder %v275, 0
  %v298 = vsub.s32 0, %v275
  %v299 = vsel %vm297, %v298, %v275
  %v300 = vshrl.u32 %v299, 4
  %v301 = vand.u32 %v299, 15
  %v302 = vsub.s32 0, %v301
  %v303 = vsel %vm297, %v302, %v301
  %vm304 = vcmp.ne.s32.totalorder %v282, 0
  %vm305 = vcmp.ne.s32.totalorder %v289, 0
  %vm306 = vcmp.ne.s32.totalorder %v296, 0
  %vm307 = vcmp.ne.s32.totalorder %v303, 0
  %vm308 = vcmp.lt.s32.totalorder %v282, 0
  %vm309 = vcmp.lt.s32.totalorder %v289, 0
  %vm310 = vcmp.lt.s32.totalorder %v296, 0
  %vm311 = vcmp.lt.s32.totalorder %v303, 0
  %vm312 = vmand %vm308, %vm304
  %vm313 = vmand %vm309, %vm305
  %vm314 = vmand %vm310, %vm306
  %vm315 = vmand %vm311, %vm307
  %v316 = vadd.s32 %v282, 16
  %v317 = vadd.s32 %v289, 16
  %v318 = vadd.s32 %v296, 16
  %v319 = vadd.s32 %v303, 16
  %v320 = vsel %vm312, %v316, %v282
  %v321 = vsel %vm313, %v317, %v289
  %v322 = vsel %vm314, %v318, %v296
  %v323 = vsel %vm315, %v319, %v303
  %vm324 = vcmp.ne.s32.totalorder %v320, 0
  %vm325 = vcmp.ne.s32.totalorder %v321, 0
  %vm326 = vcmp.ne.s32.totalorder %v322, 0
  %vm327 = vcmp.ne.s32.totalorder %v323, 0
  %v328 = vsel %vm324, %v253, 0.0
  %v329 = vsel %vm325, %v244, 0.0
  %v330 = vsel %vm326, %v246, 0.0
  %v331 = vsel %vm327, %v248, 0.0
  %vm332 = vcmp.ne.s32.totalorder %v320, 15
  %vm333 = vcmp.ne.s32.totalorder %v321, 15
  %vm334 = vcmp.ne.s32.totalorder %v322, 15
  %vm335 = vcmp.ne.s32.totalorder %v323, 15
  %v336 = vsel %vm332, %v261, 0.0
  %v337 = vsel %vm333, %v263, 0.0
  %v338 = vsel %vm334, %v265, 0.0
  %v339 = vsel %vm335, %v270, 0.0
  %340 = vmatprep.subr.mxu0 0.0
  %341 = vmatpush1.msra.mxu0 %v18
  %342 = vmatprep.subr.mxu0 0.0
  %343 = vmatpush1.msra.mxu0 %v19
  %344 = vmatprep.subr.mxu0 0.0
  %345 = vmatpush1.msra.mxu0 %v20
  %346 = vmatprep.subr.mxu0 0.0
  %347 = vmatpush1.msra.mxu0 %v21
  %348 = vmatprep.subr.mxu0 0.0
  %349 = vmatpush1.msra.mxu0 %v22
  %350 = vmatprep.subr.mxu0 0.0
  %351 = vmatpush1.msra.mxu0 %v23
  %352 = vmatprep.subr.mxu0 0.0
  %353 = vmatpush1.msra.mxu0 %v24
  %354 = vmatprep.subr.mxu0 0.0
  %355 = vmatpush1.msra.mxu0 %v25
  %356 = vmatprep.subr.mxu0 0.0
  %357 = vmatpush1.msra.mxu0 %v26
  %358 = vmatprep.subr.mxu0 0.0
  %359 = vmatpush1.msra.mxu0 %v27
  %360 = vmatprep.subr.mxu0 0.0
  %361 = vmatpush1.msra.mxu0 %v28
  %362 = vmatprep.subr.mxu0 0.0
  %363 = vmatpush1.msra.mxu0 %v29
  %364 = vmatprep.subr.mxu0 0.0
  %365 = vmatpush1.msra.mxu0 %v30
  %366 = vmatprep.subr.mxu0 0.0
  %367 = vmatpush1.msra.mxu0 %v31
  %368 = vmatprep.subr.mxu0 0.0
  %369 = vmatpush1.msra.mxu0 %v32
  %370 = vmatprep.subr.mxu0 0.0
  %371 = vmatpush1.msra.mxu0 %v33
  %372 = vmatprep.subr.mxu0 0.0
  %373 = vmatpush1.msra.mxu0 0.0
  %374 = vmatprep.subr.mxu0 0.0
  %375 = vmatpush1.msra.mxu0 0.0
  %376 = vmatprep.subr.mxu0 0.0
  %377 = vmatpush1.msra.mxu0 0.0
  %378 = vmatprep.subr.mxu0 0.0
  %379 = vmatpush1.msra.mxu0 0.0
  %380 = vmatprep.subr.mxu0 0.0
  %381 = vmatpush1.msra.mxu0 0.0
  %382 = vmatprep.subr.mxu0 0.0
  %383 = vmatpush1.msra.mxu0 0.0
  %384 = vmatprep.subr.mxu0 0.0
  %385 = vmatpush1.msra.mxu0 0.0
  %386 = vmatprep.subr.mxu0 0.0
  %387 = vmatpush1.msra.mxu0 0.0
  %388 = vmatprep.subr.mxu0 0.0
  %389 = vmatpush1.msra.mxu0 0.0
  %390 = vmatprep.subr.mxu0 0.0
  %391 = vmatpush1.msra.mxu0 0.0
  %392 = vmatprep.subr.mxu0 0.0
  %393 = vmatpush1.msra.mxu0 0.0
  %394 = vmatprep.subr.mxu0 0.0
  %395 = vmatpush1.msra.mxu0 0.0
  %396 = vmatprep.subr.mxu0 0.0
  %397 = vmatpush1.msra.mxu0 0.0
  %398 = vmatprep.subr.mxu0 0.0
  %399 = vmatpush1.msra.mxu0 0.0
  %400 = vmatprep.subr.mxu0 0.0
  %401 = vmatpush1.msra.mxu0 0.0
  %402 = vmatprep.subr.mxu0 0.0
  %403 = vmatpush1.msra.mxu0 0.0
  %404 = vmatprep.mubr.f32.mxu0 0.0
  %405 = vmatmul.mubr.f32.gmra.mrb[0].mxu0 %v13
  %v406 = vpop.f32.mrb[0].mxu0
  %v407 = vadd.f32 %v328, %v406
  %v408 = vpop.f32.mrb[0].mxu0
  %409 = vmatprep.mubr.f32.mxu0 0.0
  %410 = vmatmul.mubr.f32.gmra.mrb[0].mxu0 %v14
  %v411 = vpop.f32.mrb[0].mxu0
  %v412 = vadd.f32 %v329, %v411
  %v413 = vpop.f32.mrb[0].mxu0
  %414 = vmatprep.mubr.f32.mxu0 0.0
  %415 = vmatmul.mubr.f32.gmra.mrb[0].mxu0 %v15
  %v416 = vpop.f32.mrb[0].mxu0
  %v417 = vadd.f32 %v330, %v416
  %v418 = vpop.f32.mrb[0].mxu0
  %419 = vmatprep.mubr.f32.mxu0 0.0
  %420 = vmatmul.mubr.f32.gmra.mrb[0].mxu0 %v16
  %v421 = vpop.f32.mrb[0].mxu0
  %v422 = vadd.f32 %v331, %v421
  %v423 = vpop.f32.mrb[0].mxu0
  %424 = vdwg.mxu0
  %v425 = vadd.f32 %v407, %v336
  %v426 = vadd.f32 %v412, %v337
  %v427 = vadd.f32 %v417, %v338
  %v428 = vadd.f32 %v422, %v339
  %429 = vst [vmem:[%s2] sm:$0xff] %v425
  %430 = vst [vmem:[%s2 + $0x8] sm:$0xff] %v426
  %431 = vst [vmem:[%s2 + $0x10] sm:$0xff] %v427
  %432 = vst [vmem:[%s2 + $0x18] sm:$0xff] %v428
  %v433 = vadd.f32 %v425, %v426
  %v434 = vadd.f32 %v433, %v427
  %v435 = vadd.f32 %v434, %v428
  %v436 = vrot.slane %v435, 4
  %v437 = vadd.f32 %v435, %v436
  %v438 = vrot.slane %v437, 2
  %v439 = vadd.f32 %v437, %v438
  %v440 = vrot.slane %v439, 1
  %v441 = vadd.f32 %v439, %v440
  %442 = vst [vmem:[%s3] sm:$0x1] %v441
  %v443 = vmul.f32 %v425, %v425
  %v444 = vmul.f32 %v426, %v426
  %v445 = vmul.f32 %v427, %v427
  %v446 = vmul.f32 %v428, %v428
  %v447 = vadd.f32 %v443, %v444
  %v448 = vadd.f32 %v447, %v445
  %v449 = vadd.f32 %v448, %v446
  %v450 = vrot.slane %v449, 4
  %v451 = vadd.f32 %v449, %v450
  %v452 = vrot.slane %v451, 2
  %v453 = vadd.f32 %v451, %v452
  %v454 = vrot.slane %v453, 1
  %v455 = vadd.f32 %v453, %v454
  %456 = vst [vmem:[%s3 + $0x1] sm:$0x1] %v455
  // Predicated region
  $region10: #{basic_block_forward.3} parent=0 // pred_check
    _
  $region11: #{basic_block_forward.3} parent=0 // pred_check_branch
    %458 = sbr.rel (0) target = $region13
  $region12: #{basic_block_forward.3} parent=0 // pred_region
    _
  $region13: #{basic_block_forward.3} parent=0 // pred_fallthru
    _
  // Predicated region
  $region14: #{basic_block_forward.3} parent=0 // pred_check
    _
  $region15: #{basic_block_forward.3} parent=0 // pred_check_branch
    %460 = sbr.rel (0) target = $region17
  $region16: #{basic_block_forward.3} parent=0 // pred_region
    _
  $region17: #{basic_block_forward.3} parent=0 // pred_fallthru
    _
  // Predicated region
  $region18: #{basic_block_forward.3} parent=0 // pred_check
    _
  $region19: #{basic_block_forward.3} parent=0 // pred_check_branch
    %462 = sbr.rel (0) target = $region21
  $region20: #{basic_block_forward.3} parent=0 // pred_region
    _
  $region21: #{basic_block_forward.3} parent=0 // pred_fallthru
    _
  // Predicated region
  $region22: #{basic_block_forward.3} parent=0 // pred_check
    _
  $region23: #{basic_block_forward.3} parent=0 // pred_check_branch
    %464 = sbr.rel (0) target = $region25
  $region24: #{basic_block_forward.3} parent=0 // pred_region
    _
  $region25: #{basic_block_forward.3} parent=0 // pred_fallthru
    _

// kernel: basic_block_forward.4
$region0: #{basic_block_forward.4}
  #allocation0 [shape = 'u32[]', space=smem, size = 0x4, offset = 0x4, fixed_abs, tag = 'smem constant byte address 0x4 - core index']
  #allocation1 [shape = 'u32[144,128]{1,0:T(1,128)}', space=vmem, size = 0x12000, scoped, tag = 'internal scratch']
  %s0 = inlined_call_operand.vmem [shape: f32[2,16,128], index: 0, kind: input, shape index: {}]
  %s1 = inlined_call_operand.vmem [shape: f32[1,128], index: 1, kind: input, shape index: {}]
  %s2 = inlined_call_operand.vmem [shape: f32[1,128], index: 2, kind: input, shape index: {}]
  %s3 = inlined_call_operand.vmem [shape: f32[3,128,128], index: 3, kind: input, shape index: {}]
  %s4 = inlined_call_operand.vmem [shape: f32[2,16,128], index: 4, kind: output, shape index: {0}]
  %s5 = inlined_call_operand.vmem [shape: f32[1,2,128], index: 5, kind: output, shape index: {1}]
  %6 = xla_tuple %s4, %s5
  %s7 = sld [smem:[#allocation0]]
  $region34: #{basic_block_forward.4} parent=0
    _
  %s9 = ssub.s32 1, %s7
  %s10 = scalar_select 0, %s9, %s7
  // Predicated region
  $region2: #{basic_block_forward.4} parent=0 // pred_check
    _
  $region3: #{basic_block_forward.4} parent=0 // pred_check_branch
    %12 = sbr.rel (0) target = $region5
  $region4: #{basic_block_forward.4} parent=0 // pred_region
    _
  $region5: #{basic_block_forward.4} parent=0 // pred_fallthru
    _
  // Predicated region
  $region6: #{basic_block_forward.4} parent=0 // pred_check
    _
  $region7: #{basic_block_forward.4} parent=0 // pred_check_branch
    %14 = sbr.rel (0) target = $region9
  $region8: #{basic_block_forward.4} parent=0 // pred_region
    _
  $region9: #{basic_block_forward.4} parent=0 // pred_fallthru
    _
  // Predicated region
  $region10: #{basic_block_forward.4} parent=0 // pred_check
    _
  $region11: #{basic_block_forward.4} parent=0 // pred_check_branch
    %16 = sbr.rel (0) target = $region13
  $region12: #{basic_block_forward.4} parent=0 // pred_region
    _
  $region13: #{basic_block_forward.4} parent=0 // pred_fallthru
    _
  // Predicated region
  $region14: #{basic_block_forward.4} parent=0 // pred_check
    _
  $region15: #{basic_block_forward.4} parent=0 // pred_check_branch
    %18 = sbr.rel (0) target = $region17
  $region16: #{basic_block_forward.4} parent=0 // pred_region
    _
  $region17: #{basic_block_forward.4} parent=0 // pred_fallthru
    _
  %v19 = vld [vmem:[%s0] sm:$0xff]
  %v20 = vld [vmem:[%s0 + $0x8] sm:$0xff]
  %v21 = vld [vmem:[%s0 + $0x10] sm:$0xff]
  %v22 = vld [vmem:[%s0 + $0x18] sm:$0xff]
  %v23 = vld [vmem:[%s1] sm:$0x1]
  %v25 = vlaneseq
  %v26 = vshrl.u32 %v25, 7
  %v27 = vsub.s32 0, %v26
  %v28 = vrot.slane %v23, %v27
  %v30 = vmul.f32 %v19, %v28
  %v31 = vmul.f32 %v20, %v28
  %v32 = vmul.f32 %v21, %v28
  %v33 = vmul.f32 %v22, %v28
  %v34 = vld [vmem:[%s2] sm:$0x1]
  %v36 = vlaneseq
  %v37 = vshrl.u32 %v36, 7
  %v38 = vsub.s32 0, %v37
  %v39 = vrot.slane %v34, %v38
  %v41 = vadd.f32 %v30, %v39
  %v42 = vadd.f32 %v31, %v39
  %v43 = vadd.f32 %v32, %v39
  %v44 = vadd.f32 %v33, %v39
  %v45 = vmax.f32 %v41, 0.0
  %v46 = vmax.f32 %v42, 0.0
  %v47 = vmax.f32 %v43, 0.0
  %v48 = vmax.f32 %v44, 0.0
  %s49 = scalar_lea.vmem %s3, 128
  %v50 = vld [vmem:[%s49] sm:$0xff]
  %v51 = vld [vmem:[%s49 + $0x8] sm:$0xff]
  %v52 = vld [vmem:[%s49 + $0x10] sm:$0xff]
  %v53 = vld [vmem:[%s49 + $0x18] sm:$0xff]
  %v54 = vld [vmem:[%s49 + $0x20] sm:$0xff]
  %v55 = vld [vmem:[%s49 + $0x28] sm:$0xff]
  %v56 = vld [vmem:[%s49 + $0x30] sm:$0xff]
  %v57 = vld [vmem:[%s49 + $0x38] sm:$0xff]
  %v58 = vld [vmem:[%s49 + $0x40] sm:$0xff]
  %v59 = vld [vmem:[%s49 + $0x48] sm:$0xff]
  %v60 = vld [vmem:[%s49 + $0x50] sm:$0xff]
  %v61 = vld [vmem:[%s49 + $0x58] sm:$0xff]
  %v62 = vld [vmem:[%s49 + $0x60] sm:$0xff]
  %v63 = vld [vmem:[%s49 + $0x68] sm:$0xff]
  %v64 = vld [vmem:[%s49 + $0x70] sm:$0xff]
  %v65 = vld [vmem:[%s49 + $0x78] sm:$0xff]
  %v66 = vld [vmem:[%s3] sm:$0xff]
  %v67 = vld [vmem:[%s3 + $0x8] sm:$0xff]
  %v68 = vld [vmem:[%s3 + $0x10] sm:$0xff]
  %v69 = vld [vmem:[%s3 + $0x18] sm:$0xff]
  %v70 = vld [vmem:[%s3 + $0x20] sm:$0xff]
  %v71 = vld [vmem:[%s3 + $0x28] sm:$0xff]
  %v72 = vld [vmem:[%s3 + $0x30] sm:$0xff]
  %v73 = vld [vmem:[%s3 + $0x38] sm:$0xff]
  %v74 = vld [vmem:[%s3 + $0x40] sm:$0xff]
  %v75 = vld [vmem:[%s3 + $0x48] sm:$0xff]
  %v76 = vld [vmem:[%s3 + $0x50] sm:$0xff]
  %v77 = vld [vmem:[%s3 + $0x58] sm:$0xff]
  %v78 = vld [vmem:[%s3 + $0x60] sm:$0xff]
  %v79 = vld [vmem:[%s3 + $0x68] sm:$0xff]
  %v80 = vld [vmem:[%s3 + $0x70] sm:$0xff]
  %v81 = vld [vmem:[%s3 + $0x78] sm:$0xff]
  %82 = vmatprep.subr.mxu0 0.0
  %83 = vmatpush1.msra.mxu0 %v66
  %84 = vmatprep.subr.mxu0 0.0
  %85 = vmatpush1.msra.mxu0 %v67
  %86 = vmatprep.subr.mxu0 0.0
  %87 = vmatpush1.msra.mxu0 %v68
  %88 = vmatprep.subr.mxu0 0.0
  %89 = vmatpush1.msra.mxu0 %v69
  %90 = vmatprep.subr.mxu0 0.0
  %91 = vmatpush1.msra.mxu0 %v70
  %92 = vmatprep.subr.mxu0 0.0
  %93 = vmatpush1.msra.mxu0 %v71
  %94 = vmatprep.subr.mxu0 0.0
  %95 = vmatpush1.msra.mxu0 %v72
  %96 = vmatprep.subr.mxu0 0.0
  %97 = vmatpush1.msra.mxu0 %v73
  %98 = vmatprep.subr.mxu0 0.0
  %99 = vmatpush1.msra.mxu0 %v74
  %100 = vmatprep.subr.mxu0 0.0
  %101 = vmatpush1.msra.mxu0 %v75
  %102 = vmatprep.subr.mxu0 0.0
  %103 = vmatpush1.msra.mxu0 %v76
  %104 = vmatprep.subr.mxu0 0.0
  %105 = vmatpush1.msra.mxu0 %v77
  %106 = vmatprep.subr.mxu0 0.0
  %107 = vmatpush1.msra.mxu0 %v78
  %108 = vmatprep.subr.mxu0 0.0
  %109 = vmatpush1.msra.mxu0 %v79
  %110 = vmatprep.subr.mxu0 0.0
  %111 = vmatpush1.msra.mxu0 %v80
  %112 = vmatprep.subr.mxu0 0.0
  %113 = vmatpush1.msra.mxu0 %v81
  %114 = vmatprep.subr.mxu0 0.0
  %115 = vmatpush1.msra.mxu0 0.0
  %116 = vmatprep.subr.mxu0 0.0
  %117 = vmatpush1.msra.mxu0 0.0
  %118 = vmatprep.subr.mxu0 0.0
  %119 = vmatpush1.msra.mxu0 0.0
  %120 = vmatprep.subr.mxu0 0.0
  %121 = vmatpush1.msra.mxu0 0.0
  %122 = vmatprep.subr.mxu0 0.0
  %123 = vmatpush1.msra.mxu0 0.0
  %124 = vmatprep.subr.mxu0 0.0
  %125 = vmatpush1.msra.mxu0 0.0
  %126 = vmatprep.subr.mxu0 0.0
  %127 = vmatpush1.msra.mxu0 0.0
  %128 = vmatprep.subr.mxu0 0.0
  %129 = vmatpush1.msra.mxu0 0.0
  %130 = vmatprep.subr.mxu0 0.0
  %131 = vmatpush1.msra.mxu0 0.0
  %132 = vmatprep.subr.mxu0 0.0
  %133 = vmatpush1.msra.mxu0 0.0
  %134 = vmatprep.subr.mxu0 0.0
  %135 = vmatpush1.msra.mxu0 0.0
  %136 = vmatprep.subr.mxu0 0.0
  %137 = vmatpush1.msra.mxu0 0.0
  %138 = vmatprep.subr.mxu0 0.0
  %139 = vmatpush1.msra.mxu0 0.0
  %140 = vmatprep.subr.mxu0 0.0
  %141 = vmatpush1.msra.mxu0 0.0
  %142 = vmatprep.subr.mxu0 0.0
  %143 = vmatpush1.msra.mxu0 0.0
  %144 = vmatprep.subr.mxu0 0.0
  %145 = vmatpush1.msra.mxu0 0.0
  %146 = vmatprep.mubr.f32.mxu0 0.0
  %147 = vmatmul.mubr.f32.gmra.mrb[0].mxu0 %v45
  %v148 = vpop.f32.mrb[0].mxu0
  %v149 = vadd.f32 0.0, %v148
  %v150 = vpop.f32.mrb[0].mxu0
  %151 = vmatprep.mubr.f32.mxu0 0.0
  %152 = vmatmul.mubr.f32.gmra.mrb[0].mxu0 %v46
  %v153 = vpop.f32.mrb[0].mxu0
  %v154 = vadd.f32 0.0, %v153
  %v155 = vpop.f32.mrb[0].mxu0
  %156 = vmatprep.mubr.f32.mxu0 0.0
  %157 = vmatmul.mubr.f32.gmra.mrb[0].mxu0 %v47
  %v158 = vpop.f32.mrb[0].mxu0
  %v159 = vadd.f32 0.0, %v158
  %v160 = vpop.f32.mrb[0].mxu0
  %161 = vmatprep.mubr.f32.mxu0 0.0
  %162 = vmatmul.mubr.f32.gmra.mrb[0].mxu0 %v48
  %v163 = vpop.f32.mrb[0].mxu0
  %v164 = vadd.f32 0.0, %v163
  %v165 = vpop.f32.mrb[0].mxu0
  %166 = vdwg.mxu0
  %s167 = scalar_lea.vmem %s3, 256
  %v168 = vld [vmem:[%s167] sm:$0xff]
  %v169 = vld [vmem:[%s167 + $0x8] sm:$0xff]
  %v170 = vld [vmem:[%s167 + $0x10] sm:$0xff]
  %v171 = vld [vmem:[%s167 + $0x18] sm:$0xff]
  %v172 = vld [vmem:[%s167 + $0x20] sm:$0xff]
  %v173 = vld [vmem:[%s167 + $0x28] sm:$0xff]
  %v174 = vld [vmem:[%s167 + $0x30] sm:$0xff]
  %v175 = vld [vmem:[%s167 + $0x38] sm:$0xff]
  %v176 = vld [vmem:[%s167 + $0x40] sm:$0xff]
  %v177 = vld [vmem:[%s167 + $0x48] sm:$0xff]
  %v178 = vld [vmem:[%s167 + $0x50] sm:$0xff]
  %v179 = vld [vmem:[%s167 + $0x58] sm:$0xff]
  %v180 = vld [vmem:[%s167 + $0x60] sm:$0xff]
  %v181 = vld [vmem:[%s167 + $0x68] sm:$0xff]
  %v182 = vld [vmem:[%s167 + $0x70] sm:$0xff]
  %v183 = vld [vmem:[%s167 + $0x78] sm:$0xff]
  %184 = vmatprep.subr.mxu0 0.0
  %185 = vmatpush1.msra.mxu0 %v168
  %186 = vmatprep.subr.mxu0 0.0
  %187 = vmatpush1.msra.mxu0 %v169
  %188 = vmatprep.subr.mxu0 0.0
  %189 = vmatpush1.msra.mxu0 %v170
  %190 = vmatprep.subr.mxu0 0.0
  %191 = vmatpush1.msra.mxu0 %v171
  %192 = vmatprep.subr.mxu0 0.0
  %193 = vmatpush1.msra.mxu0 %v172
  %194 = vmatprep.subr.mxu0 0.0
  %195 = vmatpush1.msra.mxu0 %v173
  %196 = vmatprep.subr.mxu0 0.0
  %197 = vmatpush1.msra.mxu0 %v174
  %198 = vmatprep.subr.mxu0 0.0
  %199 = vmatpush1.msra.mxu0 %v175
  %200 = vmatprep.subr.mxu0 0.0
  %201 = vmatpush1.msra.mxu0 %v176
  %202 = vmatprep.subr.mxu0 0.0
  %203 = vmatpush1.msra.mxu0 %v177
  %204 = vmatprep.subr.mxu0 0.0
  %205 = vmatpush1.msra.mxu0 %v178
  %206 = vmatprep.subr.mxu0 0.0
  %207 = vmatpush1.msra.mxu0 %v179
  %208 = vmatprep.subr.mxu0 0.0
  %209 = vmatpush1.msra.mxu0 %v180
  %210 = vmatprep.subr.mxu0 0.0
  %211 = vmatpush1.msra.mxu0 %v181
  %212 = vmatprep.subr.mxu0 0.0
  %213 = vmatpush1.msra.mxu0 %v182
  %214 = vmatprep.subr.mxu0 0.0
  %215 = vmatpush1.msra.mxu0 %v183
  %216 = vmatprep.subr.mxu0 0.0
  %217 = vmatpush1.msra.mxu0 0.0
  %218 = vmatprep.subr.mxu0 0.0
  %219 = vmatpush1.msra.mxu0 0.0
  %220 = vmatprep.subr.mxu0 0.0
  %221 = vmatpush1.msra.mxu0 0.0
  %222 = vmatprep.subr.mxu0 0.0
  %223 = vmatpush1.msra.mxu0 0.0
  %224 = vmatprep.subr.mxu0 0.0
  %225 = vmatpush1.msra.mxu0 0.0
  %226 = vmatprep.subr.mxu0 0.0
  %227 = vmatpush1.msra.mxu0 0.0
  %228 = vmatprep.subr.mxu0 0.0
  %229 = vmatpush1.msra.mxu0 0.0
  %230 = vmatprep.subr.mxu0 0.0
  %231 = vmatpush1.msra.mxu0 0.0
  %232 = vmatprep.subr.mxu0 0.0
  %233 = vmatpush1.msra.mxu0 0.0
  %234 = vmatprep.subr.mxu0 0.0
  %235 = vmatpush1.msra.mxu0 0.0
  %236 = vmatprep.subr.mxu0 0.0
  %237 = vmatpush1.msra.mxu0 0.0
  %238 = vmatprep.subr.mxu0 0.0
  %239 = vmatpush1.msra.mxu0 0.0
  %240 = vmatprep.subr.mxu0 0.0
  %241 = vmatpush1.msra.mxu0 0.0
  %242 = vmatprep.subr.mxu0 0.0
  %243 = vmatpush1.msra.mxu0 0.0
  %244 = vmatprep.subr.mxu0 0.0
  %245 = vmatpush1.msra.mxu0 0.0
  %246 = vmatprep.subr.mxu0 0.0
  %247 = vmatpush1.msra.mxu0 0.0
  %248 = vmatprep.mubr.f32.mxu0 0.0
  %249 = vmatmul.mubr.f32.gmra.mrb[0].mxu0 %v45
  %v250 = vpop.f32.mrb[0].mxu0
  %v251 = vadd.f32 0.0, %v250
  %v252 = vpop.f32.mrb[0].mxu0
  %253 = vmatprep.mubr.f32.mxu0 0.0
  %254 = vmatmul.mubr.f32.gmra.mrb[0].mxu0 %v46
  %v255 = vpop.f32.mrb[0].mxu0
  %v256 = vadd.f32 0.0, %v255
  %v257 = vpop.f32.mrb[0].mxu0
  %258 = vmatprep.mubr.f32.mxu0 0.0
  %259 = vmatmul.mubr.f32.gmra.mrb[0].mxu0 %v47
  %v260 = vpop.f32.mrb[0].mxu0
  %v261 = vadd.f32 0.0, %v260
  %v262 = vpop.f32.mrb[0].mxu0
  %263 = vmatprep.mubr.f32.mxu0 0.0
  %264 = vmatmul.mubr.f32.gmra.mrb[0].mxu0 %v48
  %v265 = vpop.f32.mrb[0].mxu0
  %v266 = vadd.f32 0.0, %v265
  %v267 = vpop.f32.mrb[0].mxu0
  %268 = vdwg.mxu0
  %vm273 = vcmask 1040384
  %v274 = vrot.slane %v149, 7
  %v275 = vrot.slane %v154, 7
  %v276 = vsel %vm273, %v274, %v275
  %v277 = vrot.slane %v159, 7
  %v278 = vsel %vm273, %v275, %v277
  %v279 = vrot.slane %v164, 7
  %v280 = vsel %vm273, %v277, %v279
  %v285 = vsel %vm273, 0.0, %v274
  %vm290 = vcmask 1046528
  %v291 = vrot.slane %v251, 1
  %v292 = vrot.slane %v256, 1
  %v293 = vsel %vm290, %v291, %v292
  %v294 = vrot.slane %v261, 1
  %v295 = vsel %vm290, %v292, %v294
  %v296 = vrot.slane %v266, 1
  %v297 = vsel %vm290, %v294, %v296
  %v302 = vsel %vm290, %v296, 0.0
  %v303 = vlaneseq
  %v304 = vshrl.u32 %v303, 7
  %v305 = vadd.s32 %v304, 8
  %v306 = vadd.s32 %v304, 16
  %v307 = vadd.s32 %v304, 24
  %vm308 = vcmp.lt.s32.totalorder %v304, 0
  %v309 = vsub.s32 0, %v304
  %v310 = vsel %vm308, %v309, %v304
  %v311 = vshrl.u32 %v310, 4
  %v312 = vand.u32 %v310, 15
  %v313 = vsub.s32 0, %v312
  %v314 = vsel %vm308, %v313, %v312
  %vm315 = vcmp.lt.s32.totalorder %v305, 0
  %v316 = vsub.s32 0, %v305
  %v317 = vsel %vm315, %v316, %v305
  %v318 = vshrl.u32 %v317, 4
  %v319 = vand.u32 %v317, 15
  %v320 = vsub.s32 0, %v319
  %v321 = vsel %vm315, %v320, %v319
  %vm322 = vcmp.lt.s32.totalorder %v306, 0
  %v323 = vsub.s32 0, %v306
  %v324 = vsel %vm322, %v323, %v306
  %v325 = vshrl.u32 %v324, 4
  %v326 = vand.u32 %v324, 15
  %v327 = vsub.s32 0, %v326
  %v328 = vsel %vm322, %v327, %v326
  %vm329 = vcmp.lt.s32.totalorder %v307, 0
  %v330 = vsub.s32 0, %v307
  %v331 = vsel %vm329, %v330, %v307
  %v332 = vshrl.u32 %v331, 4
  %v333 = vand.u32 %v331, 15
  %v334 = vsub.s32 0, %v333
  %v335 = vsel %vm329, %v334, %v333
  %vm336 = vcmp.ne.s32.totalorder %v314, 0
  %vm337 = vcmp.ne.s32.totalorder %v321, 0
  %vm338 = vcmp.ne.s32.totalorder %v328, 0
  %vm339 = vcmp.ne.s32.totalorder %v335, 0
  %vm340 = vcmp.lt.s32.totalorder %v314, 0
  %vm341 = vcmp.lt.s32.totalorder %v321, 0
  %vm342 = vcmp.lt.s32.totalorder %v328, 0
  %vm343 = vcmp.lt.s32.totalorder %v335, 0
  %vm344 = vmand %vm340, %vm336
  %vm345 = vmand %vm341, %vm337
  %vm346 = vmand %vm342, %vm338
  %vm347 = vmand %vm343, %vm339
  %v348 = vadd.s32 %v314, 16
  %v349 = vadd.s32 %v321, 16
  %v350 = vadd.s32 %v328, 16
  %v351 = vadd.s32 %v335, 16
  %v352 = vsel %vm344, %v348, %v314
  %v353 = vsel %vm345, %v349, %v321
  %v354 = vsel %vm346, %v350, %v328
  %v355 = vsel %vm347, %v351, %v335
  %vm356 = vcmp.ne.s32.totalorder %v352, 0
  %vm357 = vcmp.ne.s32.totalorder %v353, 0
  %vm358 = vcmp.ne.s32.totalorder %v354, 0
  %vm359 = vcmp.ne.s32.totalorder %v355, 0
  %v360 = vsel %vm356, %v285, 0.0
  %v361 = vsel %vm357, %v276, 0.0
  %v362 = vsel %vm358, %v278, 0.0
  %v363 = vsel %vm359, %v280, 0.0
  %vm364 = vcmp.ne.s32.totalorder %v352, 15
  %vm365 = vcmp.ne.s32.totalorder %v353, 15
  %vm366 = vcmp.ne.s32.totalorder %v354, 15
  %vm367 = vcmp.ne.s32.totalorder %v355, 15
  %v368 = vsel %vm364, %v293, 0.0
  %v369 = vsel %vm365, %v295, 0.0
  %v370 = vsel %vm366, %v297, 0.0
  %v371 = vsel %vm367, %v302, 0.0
  %372 = vmatprep.subr.mxu0 0.0
  %373 = vmatpush1.msra.mxu0 %v50
  %374 = vmatprep.subr.mxu0 0.0
  %375 = vmatpush1.msra.mxu0 %v51
  %376 = vmatprep.subr.mxu0 0.0
  %377 = vmatpush1.msra.mxu0 %v52
  %378 = vmatprep.subr.mxu0 0.0
  %379 = vmatpush1.msra.mxu0 %v53
  %380 = vmatprep.subr.mxu0 0.0
  %381 = vmatpush1.msra.mxu0 %v54
  %382 = vmatprep.subr.mxu0 0.0
  %383 = vmatpush1.msra.mxu0 %v55
  %384 = vmatprep.subr.mxu0 0.0
  %385 = vmatpush1.msra.mxu0 %v56
  %386 = vmatprep.subr.mxu0 0.0
  %387 = vmatpush1.msra.mxu0 %v57
  %388 = vmatprep.subr.mxu0 0.0
  %389 = vmatpush1.msra.mxu0 %v58
  %390 = vmatprep.subr.mxu0 0.0
  %391 = vmatpush1.msra.mxu0 %v59
  %392 = vmatprep.subr.mxu0 0.0
  %393 = vmatpush1.msra.mxu0 %v60
  %394 = vmatprep.subr.mxu0 0.0
  %395 = vmatpush1.msra.mxu0 %v61
  %396 = vmatprep.subr.mxu0 0.0
  %397 = vmatpush1.msra.mxu0 %v62
  %398 = vmatprep.subr.mxu0 0.0
  %399 = vmatpush1.msra.mxu0 %v63
  %400 = vmatprep.subr.mxu0 0.0
  %401 = vmatpush1.msra.mxu0 %v64
  %402 = vmatprep.subr.mxu0 0.0
  %403 = vmatpush1.msra.mxu0 %v65
  %404 = vmatprep.subr.mxu0 0.0
  %405 = vmatpush1.msra.mxu0 0.0
  %406 = vmatprep.subr.mxu0 0.0
  %407 = vmatpush1.msra.mxu0 0.0
  %408 = vmatprep.subr.mxu0 0.0
  %409 = vmatpush1.msra.mxu0 0.0
  %410 = vmatprep.subr.mxu0 0.0
  %411 = vmatpush1.msra.mxu0 0.0
  %412 = vmatprep.subr.mxu0 0.0
  %413 = vmatpush1.msra.mxu0 0.0
  %414 = vmatprep.subr.mxu0 0.0
  %415 = vmatpush1.msra.mxu0 0.0
  %416 = vmatprep.subr.mxu0 0.0
  %417 = vmatpush1.msra.mxu0 0.0
  %418 = vmatprep.subr.mxu0 0.0
  %419 = vmatpush1.msra.mxu0 0.0
  %420 = vmatprep.subr.mxu0 0.0
  %421 = vmatpush1.msra.mxu0 0.0
  %422 = vmatprep.subr.mxu0 0.0
  %423 = vmatpush1.msra.mxu0 0.0
  %424 = vmatprep.subr.mxu0 0.0
  %425 = vmatpush1.msra.mxu0 0.0
  %426 = vmatprep.subr.mxu0 0.0
  %427 = vmatpush1.msra.mxu0 0.0
  %428 = vmatprep.subr.mxu0 0.0
  %429 = vmatpush1.msra.mxu0 0.0
  %430 = vmatprep.subr.mxu0 0.0
  %431 = vmatpush1.msra.mxu0 0.0
  %432 = vmatprep.subr.mxu0 0.0
  %433 = vmatpush1.msra.mxu0 0.0
  %434 = vmatprep.subr.mxu0 0.0
  %435 = vmatpush1.msra.mxu0 0.0
  %436 = vmatprep.mubr.f32.mxu0 0.0
  %437 = vmatmul.mubr.f32.gmra.mrb[0].mxu0 %v45
  %v438 = vpop.f32.mrb[0].mxu0
  %v439 = vadd.f32 %v360, %v438
  %v440 = vpop.f32.mrb[0].mxu0
  %441 = vmatprep.mubr.f32.mxu0 0.0
  %442 = vmatmul.mubr.f32.gmra.mrb[0].mxu0 %v46
  %v443 = vpop.f32.mrb[0].mxu0
  %v444 = vadd.f32 %v361, %v443
  %v445 = vpop.f32.mrb[0].mxu0
  %446 = vmatprep.mubr.f32.mxu0 0.0
  %447 = vmatmul.mubr.f32.gmra.mrb[0].mxu0 %v47
  %v448 = vpop.f32.mrb[0].mxu0
  %v449 = vadd.f32 %v362, %v448
  %v450 = vpop.f32.mrb[0].mxu0
  %451 = vmatprep.mubr.f32.mxu0 0.0
  %452 = vmatmul.mubr.f32.gmra.mrb[0].mxu0 %v48
  %v453 = vpop.f32.mrb[0].mxu0
  %v454 = vadd.f32 %v363, %v453
  %v455 = vpop.f32.mrb[0].mxu0
  %456 = vdwg.mxu0
  %v457 = vadd.f32 %v439, %v368
  %v458 = vadd.f32 %v444, %v369
  %v459 = vadd.f32 %v449, %v370
  %v460 = vadd.f32 %v454, %v371
  %461 = vst [vmem:[%s4] sm:$0xff] %v457
  %462 = vst [vmem:[%s4 + $0x8] sm:$0xff] %v458
  %463 = vst [vmem:[%s4 + $0x10] sm:$0xff] %v459
  %464 = vst [vmem:[%s4 + $0x18] sm:$0xff] %v460
  %v465 = vadd.f32 %v457, %v458
  %v466 = vadd.f32 %v465, %v459
  %v467 = vadd.f32 %v466, %v460
  %v468 = vrot.slane %v467, 4
  %v469 = vadd.f32 %v467, %v468
  %v470 = vrot.slane %v469, 2
  %v471 = vadd.f32 %v469, %v470
  %v472 = vrot.slane %v471, 1
  %v473 = vadd.f32 %v471, %v472
  %474 = vst [vmem:[%s5] sm:$0x1] %v473
  %v475 = vmul.f32 %v457, %v457
  %v476 = vmul.f32 %v458, %v458
  %v477 = vmul.f32 %v459, %v459
  %v478 = vmul.f32 %v460, %v460
  %v479 = vadd.f32 %v475, %v476
  %v480 = vadd.f32 %v479, %v477
  %v481 = vadd.f32 %v480, %v478
  %v482 = vrot.slane %v481, 4
  %v483 = vadd.f32 %v481, %v482
  %v484 = vrot.slane %v483, 2
  %v485 = vadd.f32 %v483, %v484
  %v486 = vrot.slane %v485, 1
  %v487 = vadd.f32 %v485, %v486
  %488 = vst [vmem:[%s5 + $0x1] sm:$0x1] %v487
  // Predicated region
  $region18: #{basic_block_forward.4} parent=0 // pred_check
    _
  $region19: #{basic_block_forward.4} parent=0 // pred_check_branch
    %490 = sbr.rel (0) target = $region21
  $region20: #{basic_block_forward.4} parent=0 // pred_region
    _
  $region21: #{basic_block_forward.4} parent=0 // pred_fallthru
    _
  // Predicated region
  $region22: #{basic_block_forward.4} parent=0 // pred_check
    _
  $region23: #{basic_block_forward.4} parent=0 // pred_check_branch
    %492 = sbr.rel (0) target = $region25
  $region24: #{basic_block_forward.4} parent=0 // pred_region
    _
  $region25: #{basic_block_forward.4} parent=0 // pred_fallthru
    _
  // Predicated region
  $region26: #{basic_block_forward.4} parent=0 // pred_check
    _
  $region27: #{basic_block_forward.4} parent=0 // pred_check_branch
    %494 = sbr.rel (0) target = $region29
  $region28: #{basic_block_forward.4} parent=0 // pred_region
    _
  $region29: #{basic_block_forward.4} parent=0 // pred_fallthru
    _
  // Predicated region
  $region30: #{basic_block_forward.4} parent=0 // pred_check
    _
  $region31: #{basic_block_forward.4} parent=0 // pred_check_branch
    %496 = sbr.rel (0) target = $region33
  $region32: #{basic_block_forward.4} parent=0 // pred_region
    _
  $region33: #{basic_block_forward.4} parent=0 // pred_fallthru
    _

</llo_original>
